<compile_context>
chip_gen: v7x
topology: tpu7x:2x2x1
jax: 0.10.0
libtpu: 0.0.40
codegen_flags: <defaults>
</compile_context>

<pallas_src>
import functools
from types import SimpleNamespace

import numpy as np
import jax
import jax.numpy as jnp
from jax.experimental import pallas as pl
from jax.experimental.pallas import tpu as pltpu


# --------------------------------------------------------------------------- #
# helpers
# --------------------------------------------------------------------------- #
def _round_up(x, m):
    return (x + m - 1) // m * m


def _tile(dim, default):
    """Pick (tile, padded_dim): full-dim block when small, aligned tiles when big."""
    if dim <= default:
        return dim, dim
    return default, _round_up(dim, default)


def _fold_bn(conv, eps=1e-5):
    """Fold eval-mode BatchNorm1d into the conv weight/bias (exact math)."""
    scale = conv["bn_g"] / jnp.sqrt(conv["bn_var"] + eps)              # (Cout,)
    w = jnp.transpose(conv["w"], (2, 1, 0)) * scale                    # (K, Cin, Cout)
    b = (conv["b"] - conv["bn_mean"]) * scale + conv["bn_b"]           # (Cout,)
    return {"w": w.astype(jnp.bfloat16),                               # bf16 MXU feed
            "b": b.reshape(1, -1).astype(jnp.float32)}                 # f32 epilogue


# --------------------------------------------------------------------------- #
# Fused conv stack: [Conv1d('same') + folded-BN + ReLU] x n_layers, one kernel
# --------------------------------------------------------------------------- #
def _conv_stack_kernel(x_ref, *refs, n_layers, ksize, pad, out_len, slab_rows):
    # refs = (w_0..w_{n-1}, b_0..b_{n-1}, o_ref, slab)
    w_refs = refs[:n_layers]
    b_refs = refs[n_layers:2 * n_layers]
    o_ref = refs[2 * n_layers]
    slab = refs[2 * n_layers + 1]          # (R, Cmax) bf16 VMEM scratch

    L, R = out_len, slab_rows
    # Zero the tail/halo rows once per grid step (tiny memset). Rows >= L stay
    # zero for every layer, which makes the circular rolls below exact 'same'
    # zero padding.
    slab[L:R, :] = jnp.zeros((R - L, slab.shape[1]), slab.dtype)
    # Stage the layer-0 input at sublane-aligned row 0.
    slab[0:L, 0:x_ref.shape[2]] = x_ref[0]

    for l in range(n_layers):              # unrolled at trace time
        w = w_refs[l]                       # (K, Cin, Cout) bf16, BN-folded
        cin, cout = w.shape[1], w.shape[2]
        hp = slab[:, 0:cin]                 # (R, Cin) bf16, rows >= L are zero
        acc = jnp.zeros((R, cout), jnp.float32)
        for k in range(ksize):              # unrolled taps: MXU matmul + XLU roll
            y = jnp.dot(hp, w[k], preferred_element_type=jnp.float32)
            shift = (pad - k) % R           # realign tap k; wraps hit zero rows
            if shift:
                y = pltpu.roll(y, shift=shift, axis=0)
            acc = acc + y
        out = jnp.maximum(acc[0:L, :] + b_refs[l][...], 0.0)   # f32 bias + ReLU
        # TODO(synk): F.dropout(p=0.5, training=True) is stochastic; eval-mode identity here.
        if l + 1 < n_layers:
            slab[0:L, 0:cout] = out.astype(slab.dtype)          # stays in VMEM
        else:
            o_ref[0] = out.astype(o_ref.dtype)


def conv_stack_bn_relu(x_bf16, layers):
    """x: (B, L, Cin0) bf16; layers: list of {'w': (K,Cin,Cout) bf16, 'b': (1,Cout) f32}."""
    B, L, cin0 = x_bf16.shape
    K = layers[0]["w"].shape[0]
    assert K % 2 == 1, "'same' padding here requires an odd kernel size"
    pad = (K - 1) // 2
    cmax = max([cin0] + [l["w"].shape[2] for l in layers])
    R = _round_up(L + K - 1, 8)             # padded slab rows (sublane aligned)
    cout_last = layers[-1]["w"].shape[2]
    n = len(layers)

    in_specs = [pl.BlockSpec((1, L, cin0), lambda b: (b, 0, 0))]
    args = [x_bf16]
    for lyr in layers:
        Kl, ci, co = lyr["w"].shape
        in_specs.append(pl.BlockSpec((Kl, ci, co), lambda b: (0, 0, 0)))
        args.append(lyr["w"])
    for lyr in layers:
        co = lyr["b"].shape[1]
        in_specs.append(pl.BlockSpec((1, co), lambda b: (0, 0)))
        args.append(lyr["b"])

    flops = 2 * B * R * K * sum(l["w"].shape[1] * l["w"].shape[2] for l in layers)
    bytes_accessed = (x_bf16.size * 2
                      + sum(l["w"].size * 2 + l["b"].size * 4 for l in layers)
                      + B * L * cout_last * 2)

    kern = functools.partial(_conv_stack_kernel, n_layers=n, ksize=K, pad=pad,
                             out_len=L, slab_rows=R)
    return pl.pallas_call(
        kern,
        out_shape=jax.ShapeDtypeStruct((B, L, cout_last), jnp.bfloat16),
        grid=(B,),
        in_specs=in_specs,
        out_specs=pl.BlockSpec((1, L, cout_last), lambda b: (b, 0, 0)),
        scratch_shapes=[pltpu.VMEM((R, cmax), jnp.bfloat16)],
        compiler_params=pltpu.CompilerParams(
            dimension_semantics=("parallel",),
            vmem_limit_bytes=64 * 1024 * 1024),
        cost_estimate=pl.CostEstimate(flops=int(flops), transcendentals=0,
                                      bytes_accessed=int(bytes_accessed)),
    )(*args)


# --------------------------------------------------------------------------- #
# Projection GEMM with fused bias + alpha * positional-encoding epilogue
# --------------------------------------------------------------------------- #
def _proj_kernel(x_ref, w_ref, b_ref, pos_ref, o_ref):
    # x: (1, tl, C) bf16, w: (C, tn) bf16, b: (1, tn) f32, pos: (tl, tn) f32
    y = jnp.dot(x_ref[0], w_ref[...], preferred_element_type=jnp.float32)
    o_ref[0] = (y + b_ref[...] + pos_ref[...]).astype(o_ref.dtype)


def pallas_project_pos(x3_bf16, w_bf16, b_f32, pos_f32, *, tl=256, tn=512):
    """y[b] = x3[b] @ w + bias + pos.  No reduction grid axis (C = one block)."""
    B, L, C = x3_bf16.shape
    D = w_bf16.shape[1]
    tl, Lp = _tile(L, tl)
    tn, Dp = _tile(D, tn)

    xp = x3_bf16 if Lp == L else jnp.pad(x3_bf16, ((0, 0), (0, Lp - L), (0, 0)))
    wp = w_bf16 if Dp == D else jnp.pad(w_bf16, ((0, 0), (0, Dp - D)))
    bp = jnp.pad(b_f32, (0, Dp - D)).reshape(1, Dp)
    pp = jnp.pad(pos_f32, ((0, Lp - L), (0, Dp - D)))

    flops = 2 * B * Lp * C * Dp
    bytes_accessed = xp.size * 2 + wp.size * 2 + bp.size * 4 + pp.size * 4 + B * Lp * Dp * 4

    out = pl.pallas_call(
        _proj_kernel,
        out_shape=jax.ShapeDtypeStruct((B, Lp, Dp), jnp.float32),
        grid=(B, Lp // tl, Dp // tn),
        in_specs=[
            pl.BlockSpec((1, tl, C), lambda b, i, j: (b, i, 0)),
            pl.BlockSpec((C, tn), lambda b, i, j: (0, j)),
            pl.BlockSpec((1, tn), lambda b, i, j: (0, j)),
            pl.BlockSpec((tl, tn), lambda b, i, j: (i, j)),   # pos ignores batch
        ],
        out_specs=pl.BlockSpec((1, tl, tn), lambda b, i, j: (b, i, j)),
        compiler_params=pltpu.CompilerParams(
            dimension_semantics=("parallel", "parallel", "parallel"),
            vmem_limit_bytes=64 * 1024 * 1024),
        cost_estimate=pl.CostEstimate(flops=int(flops), transcendentals=0,
                                      bytes_accessed=int(bytes_accessed)),
    )(xp, wp, bp, pp)
    if Lp != L or Dp != D:
        out = out[:, :L, :D]
    return out


# --------------------------------------------------------------------------- #
# EncoderPrenet forward
# --------------------------------------------------------------------------- #
def encoder_prenet_forward(params, txt_seq):
    B, L = txt_seq.shape
    # Embedding lookup (padding_idx=0 row zeroed at init) — plain XLA gather.
    # Cast to bf16 once: halves the conv kernel's HBM DMA and feeds the MXU natively.
    x = params["embed"][txt_seq].astype(jnp.bfloat16)            # (B, L, d_embed)

    # One fused pallas_call for the whole conv/BN/ReLU stack (VMEM resident).
    layers = [_fold_bn(c) for c in params["convs"]]
    x = conv_stack_bn_relu(x, layers)                            # (B, L, chans) bf16

    # Projection + bias + alpha*positional-encoding fused in the GEMM epilogue.
    pos = (params["alpha"] * params["pos_table"][0, :L, :]).astype(jnp.float32)  # (L, D)
    y = pallas_project_pos(x, params["proj_w"].astype(jnp.bfloat16),
                           params["proj_b"], pos)
    return y                                                     # (B, L, d_model) f32


# --------------------------------------------------------------------------- #
# Deterministic parameter initialization
# --------------------------------------------------------------------------- #
def sinusoid_table(n_position, d_hid):
    pos = np.arange(n_position)[:, None].astype(np.float64)
    hid = np.arange(d_hid)[None, :]
    angle = pos / np.power(10000.0, 2.0 * (hid // 2) / d_hid)
    table = np.zeros((n_position, d_hid), np.float64)
    table[:, 0::2] = np.sin(angle[:, 0::2])
    table[:, 1::2] = np.cos(angle[:, 1::2])
    return jnp.asarray(table, jnp.float32)[None]


def init_params(hp, key):
    keys = iter(jax.random.split(key, 4 + hp.eprenet_n_convolutions))

    embed = jax.random.normal(next(keys), (hp.n_symbols, hp.d_embed), jnp.float32) * 0.1
    embed = embed.at[0].set(0.0)                     # padding_idx=0

    convs = []
    cin = hp.d_embed
    for _ in range(hp.eprenet_n_convolutions):
        convs.append({
            "w": jax.random.normal(next(keys),
                                   (hp.eprenet_chans, cin, hp.eprenet_kernel_size),
                                   jnp.float32) * 0.05,
            "b": jnp.zeros((hp.eprenet_chans,), jnp.float32),
            "bn_g": jnp.ones((hp.eprenet_chans,), jnp.float32),
            "bn_b": jnp.zeros((hp.eprenet_chans,), jnp.float32),
            "bn_mean": jnp.zeros((hp.eprenet_chans,), jnp.float32),
            "bn_var": jnp.ones((hp.eprenet_chans,), jnp.float32),
        })
        cin = hp.eprenet_chans

    proj_w = jax.random.normal(next(keys), (hp.eprenet_chans, hp.d_model), jnp.float32) * 0.05
    proj_b = jnp.zeros((hp.d_model,), jnp.float32)

    return {"embed": embed, "convs": convs,
            "proj_w": proj_w, "proj_b": proj_b,
            "alpha": jnp.ones((1,), jnp.float32),
            "pos_table": sinusoid_table(hp.n_position, hp.d_model)}


# --------------------------------------------------------------------------- #
# main
# --------------------------------------------------------------------------- #
if __name__ == "__main__":
    hp = SimpleNamespace(
        n_symbols=10, d_embed=16,
        eprenet_chans=16, eprenet_kernel_size=3, eprenet_n_convolutions=2,
        d_model=32, n_position=64,
    )

    key = jax.random.PRNGKey(0)
    k_par, k_src = jax.random.split(key)
    params = init_params(hp, k_par)

    B, L = 2, 16
    txt_seq = jax.random.randint(k_src, (B, L), 0, hp.n_symbols, dtype=jnp.int32)

    fwd = jax.jit(encoder_prenet_forward)
    out = fwd(params, txt_seq)
    jax.block_until_ready(out)

    assert out.shape == (B, L, hp.d_model)
    assert bool(jnp.all(jnp.isfinite(out)))
    print("KERNEL_OK")
</pallas_src>

<mosaic_0001>
module attributes {stable_mosaic.version = 11 : i64} {
  func.func @_conv_stack_kernel(%arg0: i32, %arg1: memref<1x16x16xbf16, #tpu.memory_space<vmem>>, %arg2: memref<3x16x16xbf16, #tpu.memory_space<vmem>>, %arg3: memref<3x16x16xbf16, #tpu.memory_space<vmem>>, %arg4: memref<1x16xf32, #tpu.memory_space<vmem>>, %arg5: memref<1x16xf32, #tpu.memory_space<vmem>>, %arg6: memref<1x16x16xbf16, #tpu.memory_space<vmem>>, %arg7: memref<24x16xbf16, #tpu.memory_space<vmem>>) attributes {dimension_semantics = [#tpu.dimension_semantics<parallel>], iteration_bounds = array<i64: 2>, scalar_prefetch = 0 : i64, scratch_operands = 1 : i64, tpu.core_type = #tpu.core_type<tc>, window_params = [{transform_indices = @transform_0, window_bounds = array<i64: 1, 16, 16>}, {pipeline_mode = #tpu.pipeline_mode<synchronous>, transform_indices = @transform_1, window_bounds = array<i64: 3, 16, 16>}, {pipeline_mode = #tpu.pipeline_mode<synchronous>, transform_indices = @transform_2, window_bounds = array<i64: 3, 16, 16>}, {pipeline_mode = #tpu.pipeline_mode<synchronous>, transform_indices = @transform_3, window_bounds = array<i64: 1, 16>}, {pipeline_mode = #tpu.pipeline_mode<synchronous>, transform_indices = @transform_4, window_bounds = array<i64: 1, 16>}, {transform_indices = @transform_5, window_bounds = array<i64: 1, 16, 16>}]} {
    %cst = arith.constant 0.000000e+00 : bf16
    %0 = vector.broadcast %cst : bf16 to vector<8x16xbf16>
    %c16 = arith.constant 16 : index
    %c0 = arith.constant 0 : index
    %1 = vector.load %arg7[%c16, %c0] : memref<24x16xbf16, #tpu.memory_space<vmem>>, vector<8x16xbf16>
    tpu.vector_store %arg7[%c16, %c0], %0 {strides = array<i32>} : memref<24x16xbf16, #tpu.memory_space<vmem>>, vector<8x16xbf16>,
    %c0_0 = arith.constant 0 : index
    %c0_1 = arith.constant 0 : index
    %c0_2 = arith.constant 0 : index
    %2 = vector.load %arg1[%c0_0, %c0_1, %c0_2] : memref<1x16x16xbf16, #tpu.memory_space<vmem>>, vector<1x16x16xbf16>
    %3 = vector.shape_cast %2 : vector<1x16x16xbf16> to vector<16x16xbf16>
    %c0_3 = arith.constant 0 : index
    %c0_4 = arith.constant 0 : index
    %4 = vector.load %arg7[%c0_3, %c0_4] : memref<24x16xbf16, #tpu.memory_space<vmem>>, vector<16x16xbf16>
    tpu.vector_store %arg7[%c0_3, %c0_4], %3 {strides = array<i32>} : memref<24x16xbf16, #tpu.memory_space<vmem>>, vector<16x16xbf16>,
    %c0_5 = arith.constant 0 : index
    %c0_6 = arith.constant 0 : index
    %5 = vector.load %arg7[%c0_5, %c0_6] : memref<24x16xbf16, #tpu.memory_space<vmem>>, vector<24x16xbf16>
    %cst_7 = arith.constant 0.000000e+00 : f32
    %6 = vector.broadcast %cst_7 : f32 to vector<24x16xf32>
    %c0_8 = arith.constant 0 : index
    %c0_9 = arith.constant 0 : index
    %c0_10 = arith.constant 0 : index
    %7 = vector.load %arg2[%c0_8, %c0_9, %c0_10] : memref<3x16x16xbf16, #tpu.memory_space<vmem>>, vector<1x16x16xbf16>
    %8 = vector.shape_cast %7 : vector<1x16x16xbf16> to vector<16x16xbf16>
    %cst_11 = arith.constant dense<0.000000e+00> : vector<24x16xf32>
    %9 = tpu.matmul %5, %8, %cst_11 {dimension_numbers = #tpu.dot_dimension_numbers<[1], [0], [0], [1], [0, 0, 1, 1], [], []>} : vector<24x16xbf16>, vector<16x16xbf16>, vector<24x16xf32> -> vector<24x16xf32>
    %c1_i32 = arith.constant 1 : i32
    %10 = tpu.dynamic_rotate %9 by %c1_i32 dim 0 : vector<24x16xf32>, i32 -> vector<24x16xf32>
    %11 = arith.addf %6, %10 : vector<24x16xf32>
    %c1 = arith.constant 1 : index
    %c0_12 = arith.constant 0 : index
    %c0_13 = arith.constant 0 : index
    %12 = vector.load %arg2[%c1, %c0_12, %c0_13] : memref<3x16x16xbf16, #tpu.memory_space<vmem>>, vector<1x16x16xbf16>
    %13 = vector.shape_cast %12 : vector<1x16x16xbf16> to vector<16x16xbf16>
    %cst_14 = arith.constant dense<0.000000e+00> : vector<24x16xf32>
    %14 = tpu.matmul %5, %13, %cst_14 {dimension_numbers = #tpu.dot_dimension_numbers<[1], [0], [0], [1], [0, 0, 1, 1], [], []>} : vector<24x16xbf16>, vector<16x16xbf16>, vector<24x16xf32> -> vector<24x16xf32>
    %15 = arith.addf %11, %14 : vector<24x16xf32>
    %c2 = arith.constant 2 : index
    %c0_15 = arith.constant 0 : index
    %c0_16 = arith.constant 0 : index
    %16 = vector.load %arg2[%c2, %c0_15, %c0_16] : memref<3x16x16xbf16, #tpu.memory_space<vmem>>, vector<1x16x16xbf16>
    %17 = vector.shape_cast %16 : vector<1x16x16xbf16> to vector<16x16xbf16>
    %cst_17 = arith.constant dense<0.000000e+00> : vector<24x16xf32>
    %18 = tpu.matmul %5, %17, %cst_17 {dimension_numbers = #tpu.dot_dimension_numbers<[1], [0], [0], [1], [0, 0, 1, 1], [], []>} : vector<24x16xbf16>, vector<16x16xbf16>, vector<24x16xf32> -> vector<24x16xf32>
    %c23_i32 = arith.constant 23 : i32
    %19 = tpu.dynamic_rotate %18 by %c23_i32 dim 0 : vector<24x16xf32>, i32 -> vector<24x16xf32>
    %20 = arith.addf %15, %19 : vector<24x16xf32>
    %21 = vector.extract_strided_slice %20 {offsets = [0, 0], sizes = [16, 16], strides = [1, 1]} : vector<24x16xf32> to vector<16x16xf32>
    %c0_18 = arith.constant 0 : index
    %c0_19 = arith.constant 0 : index
    %22 = vector.load %arg4[%c0_18, %c0_19] : memref<1x16xf32, #tpu.memory_space<vmem>>, vector<1x16xf32>
    %23 = vector.broadcast %22 : vector<1x16xf32> to vector<16x16xf32>
    %24 = arith.addf %21, %23 : vector<16x16xf32>
    %cst_20 = arith.constant 0.000000e+00 : f32
    %25 = vector.broadcast %cst_20 : f32 to vector<16x16xf32>
    %26 = arith.maximumf %24, %25 : vector<16x16xf32>
    %27 = arith.truncf %26 : vector<16x16xf32> to vector<16x16xbf16>
    %c0_21 = arith.constant 0 : index
    %c0_22 = arith.constant 0 : index
    %28 = vector.load %arg7[%c0_21, %c0_22] : memref<24x16xbf16, #tpu.memory_space<vmem>>, vector<16x16xbf16>
    tpu.vector_store %arg7[%c0_21, %c0_22], %27 {strides = array<i32>} : memref<24x16xbf16, #tpu.memory_space<vmem>>, vector<16x16xbf16>,
    %c0_23 = arith.constant 0 : index
    %c0_24 = arith.constant 0 : index
    %29 = vector.load %arg7[%c0_23, %c0_24] : memref<24x16xbf16, #tpu.memory_space<vmem>>, vector<24x16xbf16>
    %cst_25 = arith.constant 0.000000e+00 : f32
    %30 = vector.broadcast %cst_25 : f32 to vector<24x16xf32>
    %c0_26 = arith.constant 0 : index
    %c0_27 = arith.constant 0 : index
    %c0_28 = arith.constant 0 : index
    %31 = vector.load %arg3[%c0_26, %c0_27, %c0_28] : memref<3x16x16xbf16, #tpu.memory_space<vmem>>, vector<1x16x16xbf16>
    %32 = vector.shape_cast %31 : vector<1x16x16xbf16> to vector<16x16xbf16>
    %cst_29 = arith.constant dense<0.000000e+00> : vector<24x16xf32>
    %33 = tpu.matmul %29, %32, %cst_29 {dimension_numbers = #tpu.dot_dimension_numbers<[1], [0], [0], [1], [0, 0, 1, 1], [], []>} : vector<24x16xbf16>, vector<16x16xbf16>, vector<24x16xf32> -> vector<24x16xf32>
    %c1_i32_30 = arith.constant 1 : i32
    %34 = tpu.dynamic_rotate %33 by %c1_i32_30 dim 0 : vector<24x16xf32>, i32 -> vector<24x16xf32>
    %35 = arith.addf %30, %34 : vector<24x16xf32>
    %c1_31 = arith.constant 1 : index
    %c0_32 = arith.constant 0 : index
    %c0_33 = arith.constant 0 : index
    %36 = vector.load %arg3[%c1_31, %c0_32, %c0_33] : memref<3x16x16xbf16, #tpu.memory_space<vmem>>, vector<1x16x16xbf16>
    %37 = vector.shape_cast %36 : vector<1x16x16xbf16> to vector<16x16xbf16>
    %cst_34 = arith.constant dense<0.000000e+00> : vector<24x16xf32>
    %38 = tpu.matmul %29, %37, %cst_34 {dimension_numbers = #tpu.dot_dimension_numbers<[1], [0], [0], [1], [0, 0, 1, 1], [], []>} : vector<24x16xbf16>, vector<16x16xbf16>, vector<24x16xf32> -> vector<24x16xf32>
    %39 = arith.addf %35, %38 : vector<24x16xf32>
    %c2_35 = arith.constant 2 : index
    %c0_36 = arith.constant 0 : index
    %c0_37 = arith.constant 0 : index
    %40 = vector.load %arg3[%c2_35, %c0_36, %c0_37] : memref<3x16x16xbf16, #tpu.memory_space<vmem>>, vector<1x16x16xbf16>
    %41 = vector.shape_cast %40 : vector<1x16x16xbf16> to vector<16x16xbf16>
    %cst_38 = arith.constant dense<0.000000e+00> : vector<24x16xf32>
    %42 = tpu.matmul %29, %41, %cst_38 {dimension_numbers = #tpu.dot_dimension_numbers<[1], [0], [0], [1], [0, 0, 1, 1], [], []>} : vector<24x16xbf16>, vector<16x16xbf16>, vector<24x16xf32> -> vector<24x16xf32>
    %c23_i32_39 = arith.constant 23 : i32
    %43 = tpu.dynamic_rotate %42 by %c23_i32_39 dim 0 : vector<24x16xf32>, i32 -> vector<24x16xf32>
    %44 = arith.addf %39, %43 : vector<24x16xf32>
    %45 = vector.extract_strided_slice %44 {offsets = [0, 0], sizes = [16, 16], strides = [1, 1]} : vector<24x16xf32> to vector<16x16xf32>
    %c0_40 = arith.constant 0 : index
    %c0_41 = arith.constant 0 : index
    %46 = vector.load %arg5[%c0_40, %c0_41] : memref<1x16xf32, #tpu.memory_space<vmem>>, vector<1x16xf32>
    %47 = vector.broadcast %46 : vector<1x16xf32> to vector<16x16xf32>
    %48 = arith.addf %45, %47 : vector<16x16xf32>
    %cst_42 = arith.constant 0.000000e+00 : f32
    %49 = vector.broadcast %cst_42 : f32 to vector<16x16xf32>
    %50 = arith.maximumf %48, %49 : vector<16x16xf32>
    %51 = arith.truncf %50 : vector<16x16xf32> to vector<16x16xbf16>
    %c0_43 = arith.constant 0 : index
    %c0_44 = arith.constant 0 : index
    %c0_45 = arith.constant 0 : index
    %52 = vector.load %arg6[%c0_43, %c0_44, %c0_45] : memref<1x16x16xbf16, #tpu.memory_space<vmem>>, vector<1x16x16xbf16>
    %53 = vector.shape_cast %52 : vector<1x16x16xbf16> to vector<16x16xbf16>
    %54 = vector.shape_cast %51 : vector<16x16xbf16> to vector<1x16x16xbf16>
    tpu.vector_store %arg6[%c0_43, %c0_44, %c0_45], %54 {strides = array<i32>} : memref<1x16x16xbf16, #tpu.memory_space<vmem>>, vector<1x16x16xbf16>,
    return
  }
  func.func @transform_0(%arg0: i32) -> (i32, i32, i32) {
    %c0_i32 = arith.constant 0 : i32
    %c0_i32_0 = arith.constant 0 : i32
    %c0_i32_1 = arith.constant 0 : i32
    return %arg0, %c0_i32, %c0_i32_0 : i32, i32, i32
  }
  func.func @transform_1(%arg0: i32) -> (i32, i32, i32) {
    %c0_i32 = arith.constant 0 : i32
    %c0_i32_0 = arith.constant 0 : i32
    %c0_i32_1 = arith.constant 0 : i32
    %c0_i32_2 = arith.constant 0 : i32
    return %c0_i32, %c0_i32_0, %c0_i32_1 : i32, i32, i32
  }
  func.func @transform_2(%arg0: i32) -> (i32, i32, i32) {
    %c0_i32 = arith.constant 0 : i32
    %c0_i32_0 = arith.constant 0 : i32
    %c0_i32_1 = arith.constant 0 : i32
    %c0_i32_2 = arith.constant 0 : i32
    return %c0_i32, %c0_i32_0, %c0_i32_1 : i32, i32, i32
  }
  func.func @transform_3(%arg0: i32) -> (i32, i32) {
    %c0_i32 = arith.constant 0 : i32
    %c0_i32_0 = arith.constant 0 : i32
    %c0_i32_1 = arith.constant 0 : i32
    return %c0_i32, %c0_i32_0 : i32, i32
  }
  func.func @transform_4(%arg0: i32) -> (i32, i32) {
    %c0_i32 = arith.constant 0 : i32
    %c0_i32_0 = arith.constant 0 : i32
    %c0_i32_1 = arith.constant 0 : i32
    return %c0_i32, %c0_i32_0 : i32, i32
  }
  func.func @transform_5(%arg0: i32) -> (i32, i32, i32) {
    %c0_i32 = arith.constant 0 : i32
    %c0_i32_0 = arith.constant 0 : i32
    %c0_i32_1 = arith.constant 0 : i32
    return %arg0, %c0_i32, %c0_i32_0 : i32, i32, i32
  }
}

module attributes {stable_mosaic.version = 11 : i64} {
  func.func @_proj_kernel(%arg0: i32, %arg1: i32, %arg2: i32, %arg3: memref<1x16x16xbf16, #tpu.memory_space<vmem>>, %arg4: memref<16x32xbf16, #tpu.memory_space<vmem>>, %arg5: memref<1x32xf32, #tpu.memory_space<vmem>>, %arg6: memref<16x32xf32, #tpu.memory_space<vmem>>, %arg7: memref<1x16x32xf32, #tpu.memory_space<vmem>>) attributes {dimension_semantics = [#tpu.dimension_semantics<parallel>, #tpu.dimension_semantics<parallel>, #tpu.dimension_semantics<parallel>], iteration_bounds = array<i64: 2, 1, 1>, scalar_prefetch = 0 : i64, scratch_operands = 0 : i64, tpu.core_type = #tpu.core_type<tc>, window_params = [{transform_indices = @transform_0, window_bounds = array<i64: 1, 16, 16>}, {transform_indices = @transform_1, window_bounds = array<i64: 16, 32>}, {transform_indices = @transform_2, window_bounds = array<i64: 1, 32>}, {transform_indices = @transform_3, window_bounds = array<i64: 16, 32>}, {transform_indices = @transform_4, window_bounds = array<i64: 1, 16, 32>}]} {
    %c0 = arith.constant 0 : index
    %c0_0 = arith.constant 0 : index
    %c0_1 = arith.constant 0 : index
    %0 = vector.load %arg3[%c0, %c0_0, %c0_1] : memref<1x16x16xbf16, #tpu.memory_space<vmem>>, vector<1x16x16xbf16>
    %1 = vector.shape_cast %0 : vector<1x16x16xbf16> to vector<16x16xbf16>
    %c0_2 = arith.constant 0 : index
    %c0_3 = arith.constant 0 : index
    %2 = vector.load %arg4[%c0_2, %c0_3] : memref<16x32xbf16, #tpu.memory_space<vmem>>, vector<16x32xbf16>
    %cst = arith.constant dense<0.000000e+00> : vector<16x32xf32>
    %3 = tpu.matmul %1, %2, %cst {dimension_numbers = #tpu.dot_dimension_numbers<[1], [0], [0], [1], [0, 0, 1, 1], [], []>} : vector<16x16xbf16>, vector<16x32xbf16>, vector<16x32xf32> -> vector<16x32xf32>
    %c0_4 = arith.constant 0 : index
    %c0_5 = arith.constant 0 : index
    %4 = vector.load %arg5[%c0_4, %c0_5] : memref<1x32xf32, #tpu.memory_space<vmem>>, vector<1x32xf32>
    %5 = vector.broadcast %4 : vector<1x32xf32> to vector<16x32xf32>
    %6 = arith.addf %3, %5 : vector<16x32xf32>
    %c0_6 = arith.constant 0 : index
    %c0_7 = arith.constant 0 : index
    %7 = vector.load %arg6[%c0_6, %c0_7] : memref<16x32xf32, #tpu.memory_space<vmem>>, vector<16x32xf32>
    %8 = arith.addf %6, %7 : vector<16x32xf32>
    %c0_8 = arith.constant 0 : index
    %c0_9 = arith.constant 0 : index
    %c0_10 = arith.constant 0 : index
    %9 = vector.load %arg7[%c0_8, %c0_9, %c0_10] : memref<1x16x32xf32, #tpu.memory_space<vmem>>, vector<1x16x32xf32>
    %10 = vector.shape_cast %9 : vector<1x16x32xf32> to vector<16x32xf32>
    %11 = vector.shape_cast %8 : vector<16x32xf32> to vector<1x16x32xf32>
    tpu.vector_store %arg7[%c0_8, %c0_9, %c0_10], %11 {strides = array<i32>} : memref<1x16x32xf32, #tpu.memory_space<vmem>>, vector<1x16x32xf32>,
    return
  }
  func.func @transform_0(%arg0: i32, %arg1: i32, %arg2: i32) -> (i32, i32, i32) {
    %c0_i32 = arith.constant 0 : i32
    %c0_i32_0 = arith.constant 0 : i32
    return %arg0, %arg1, %c0_i32 : i32, i32, i32
  }
  func.func @transform_1(%arg0: i32, %arg1: i32, %arg2: i32) -> (i32, i32) {
    %c0_i32 = arith.constant 0 : i32
    %c0_i32_0 = arith.constant 0 : i32
    return %c0_i32, %arg2 : i32, i32
  }
  func.func @transform_2(%arg0: i32, %arg1: i32, %arg2: i32) -> (i32, i32) {
    %c0_i32 = arith.constant 0 : i32
    %c0_i32_0 = arith.constant 0 : i32
    return %c0_i32, %arg2 : i32, i32
  }
  func.func @transform_3(%arg0: i32, %arg1: i32, %arg2: i32) -> (i32, i32) {
    %c0_i32 = arith.constant 0 : i32
    return %arg1, %arg2 : i32, i32
  }
  func.func @transform_4(%arg0: i32, %arg1: i32, %arg2: i32) -> (i32, i32, i32) {
    %c0_i32 = arith.constant 0 : i32
    return %arg0, %arg1, %arg2 : i32, i32, i32
  }
}

</mosaic_0001>

<llo_original>
// kernel: encoder_prenet_forward.3
$region0: #{encoder_prenet_forward.3}
  #allocation0 [shape = 'u32[]', space=smem, size = 0x4, offset = 0x4, fixed_abs, tag = 'smem constant byte address 0x4 - core index']
  #allocation1 [shape = 'u32[144,128]{1,0:T(1,128)}', space=vmem, size = 0x12000, scoped, tag = 'internal scratch']
  %s0 = inlined_call_operand.hbm [shape: bf16[2,16,16], index: 0, kind: input, shape index: {}]
  %s1 = inlined_call_operand.hbm [shape: bf16[16,32], index: 1, kind: input, shape index: {}]
  %s2 = inlined_call_operand.hbm [shape: f32[1,32], index: 2, kind: input, shape index: {}]
  %s3 = inlined_call_operand.hbm [shape: f32[16,32], index: 3, kind: input, shape index: {}]
  %s4 = inlined_call_operand.hbm [shape: f32[2,16,32], index: 4, kind: output, shape index: {}]
  %s5 = sld [smem:[#allocation0]]
  $region65: #{encoder_prenet_forward.3} parent=0
    _
  %s7 = ssub.s32 1, %s5
  %s8 = scalar_select 0, %s7, %s5
  $region1: #{encoder_prenet_forward.3} parent=0
    #allocation2 [shape = 'u8[8192]{0}', space=vmem, size = 0x2000, scoped, tag = 'input window, operand 0']
    #allocation3 [shape = 's32[2]{0}', space=sflag, size = 0x8, scoped, tag = 'scoped memory for encoder_prenet_forward.3']
    #allocation4 [shape = 's32[2]{0}', space=sflag, size = 0x8, scoped, tag = 'scoped memory for encoder_prenet_forward.3']
    #allocation5 [shape = 'u8[4096]{0}', space=vmem, size = 0x1000, scoped, tag = 'input window, operand 1, single buffered']
    #allocation6 [shape = 's32[1]{0}', space=sflag, size = 0x4, scoped, tag = 'scoped memory for encoder_prenet_forward.3']
    #allocation7 [shape = 'u8[512]{0}', space=vmem, size = 0x400, scoped, tag = 'input window, operand 2, single buffered']
    #allocation8 [shape = 'u8[8192]{0}', space=vmem, size = 0x2000, scoped, tag = 'input window, operand 3, single buffered']
    #allocation9 [shape = 's32[1]{0}', space=sflag, size = 0x4, scoped, tag = 'scoped memory for encoder_prenet_forward.3']
    #allocation10 [shape = 'u8[16384]{0}', space=vmem, size = 0x4000, scoped, tag = 'output window, operand 0']
    %9 = vsyncpa [#allocation3], 0
    %s10 = scalar_lea.sflag [#allocation3], 1
    %11 = vsyncpa %s10, 0
    %12 = vsyncpa [#allocation6], 0
    %13 = vsyncpa [#allocation9], 0
    %14 = vsyncpa [#allocation4], 0
    %s15 = scalar_lea.sflag [#allocation4], 1
    %16 = vsyncpa %s15, 0
    loop: start=0, step=1, limit=4
    $region2: #{encoder_prenet_forward.3} parent=1 // loop_pre_header
      _
    $region3: #{encoder_prenet_forward.3} parent=1 // loop_header
      %s18 = sphi 0, %s22
      %p19 = scmp.ge.s32.totalorder %s18, 4
      %s25 = sphi 0, %s44
      %s26 = sphi 0, %s40
      %s27 = sphi 0, %s36
      %s28 = sphi 0, %s25
      %s29 = sphi 0, %s26
      %s30 = sphi 0, %s27
      %s31 = sphi 0, %s28
      %s32 = sphi 0, %s29
      %s33 = sphi 0, %s30
      %s49 = sphi 0, %s51
      %s52 = sphi 0, %s49
      %s53 = sphi 0, %s52
      %s69 = sphi 0, %s53
      %s75 = sphi 0, %s77
      %s78 = sphi 0, %s75
      %s79 = sphi 0, %s78
      %s95 = sphi 0, %s79
      %s101 = sphi 0, %s103
      %s104 = sphi 0, %s101
      %s105 = sphi 0, %s104
      %s121 = sphi 0, %s105
      %s129 = sphi 0, %s131
      %s132 = sphi 0, %s129
      %s133 = sphi 0, %s132
      %s149 = sphi 0, %s133
      %s159 = sphi 0, %s161
      %s162 = sphi 0, %s159
      %s163 = sphi 0, %s162
      %s179 = sphi 0, %s163
    $region4: #{encoder_prenet_forward.3} parent=1 // loop_header_branch
      %21 = sbr.rel (%p19) target = $region8
    $region5: #{encoder_prenet_forward.3} parent=1 // loop_body
      %s23 = ssub.s32 %s18, 1
      %s24 = ssub.s32 %s18, 2
      %s34 = sadd.s32 1, %s27
      %p35 = scmp.ge.s32.totalorder %s34, 1
      %s36 = scalar_select %p35, 0, %s34
      %s37 = sadd.s32 1, %s26
      %s38 = scalar_select %p35, %s37, %s26
      %p39 = scmp.ge.s32.totalorder %s38, 1
      %s40 = scalar_select %p39, 0, %s38
      %s41 = sadd.s32 1, %s25
      %s42 = scalar_select %p39, %s41, %s25
      %p43 = scmp.ge.s32.totalorder %s42, 2
      %s44 = scalar_select %p43, 0, %s42
      %s45 = ssub.s32 %s25, %s44
      %s46 = ssub.s32 %s26, %s40
      %s47 = sor.u32 %s45, %s46
      %p48 = scmp.eq.s32.totalorder %s47, 0
      %s50 = sadd.s32 %s49, 1
      %s51 = scalar_select %p48, %s49, %s50
      %p54 = pneg %p48
      %p55 = scmp.eq.s32.totalorder %s18, 1
      %p56 = por %p54, %p55
      %p57 = scmp.ne.s32.totalorder %s49, %s52
      %p58 = scmp.eq.s32.totalorder %s18, 0
      %p59 = por %p57, %p58
      %p60 = scmp.ne.s32.totalorder %s49, %s52
      %p61 = scmp.eq.s32.totalorder %s23, 1
      %p62 = por %p60, %p61
      %p63 = scmp.ne.s32.totalorder %s52, %s53
      %p64 = scmp.eq.s32.totalorder %s23, 0
      %p65 = por %p63, %p64
      %p66 = scmp.ne.s32.totalorder %s52, %s53
      %p67 = scmp.eq.s32.totalorder %s24, 1
      %p68 = por %p66, %p67
      %p70 = scmp.ne.s32.totalorder %s53, %s69
      %p71 = scmp.eq.s32.totalorder %s24, 0
      %p72 = por %p70, %p71
      %s73 = ssub.s32 %s27, %s36
      %p74 = scmp.eq.s32.totalorder %s73, 0
      %s76 = sadd.s32 %s75, 1
      %s77 = scalar_select %p74, %s75, %s76
      %p80 = pneg %p74
      %p81 = scmp.eq.s32.totalorder %s18, 1
      %p82 = por %p80, %p81
      %p83 = scmp.ne.s32.totalorder %s75, %s78
      %p84 = scmp.eq.s32.totalorder %s18, 0
      %p85 = por %p83, %p84
      %p86 = scmp.ne.s32.totalorder %s75, %s78
      %p87 = scmp.eq.s32.totalorder %s23, 1
      %p88 = por %p86, %p87
      %p89 = scmp.ne.s32.totalorder %s78, %s79
      %p90 = scmp.eq.s32.totalorder %s23, 0
      %p91 = por %p89, %p90
      %p92 = scmp.ne.s32.totalorder %s78, %s79
      %p93 = scmp.eq.s32.totalorder %s24, 1
      %p94 = por %p92, %p93
      %p96 = scmp.ne.s32.totalorder %s79, %s95
      %p97 = scmp.eq.s32.totalorder %s24, 0
      %p98 = por %p96, %p97
      %s99 = ssub.s32 %s27, %s36
      %p100 = scmp.eq.s32.totalorder %s99, 0
      %s102 = sadd.s32 %s101, 1
      %s103 = scalar_select %p100, %s101, %s102
      %p106 = pneg %p100
      %p107 = scmp.eq.s32.totalorder %s18, 1
      %p108 = por %p106, %p107
      %p109 = scmp.ne.s32.totalorder %s101, %s104
      %p110 = scmp.eq.s32.totalorder %s18, 0
      %p111 = por %p109, %p110
      %p112 = scmp.ne.s32.totalorder %s101, %s104
      %p113 = scmp.eq.s32.totalorder %s23, 1
      %p114 = por %p112, %p113
      %p115 = scmp.ne.s32.totalorder %s104, %s105
      %p116 = scmp.eq.s32.totalorder %s23, 0
      %p117 = por %p115, %p116
      %p118 = scmp.ne.s32.totalorder %s104, %s105
      %p119 = scmp.eq.s32.totalorder %s24, 1
      %p120 = por %p118, %p119
      %p122 = scmp.ne.s32.totalorder %s105, %s121
      %p123 = scmp.eq.s32.totalorder %s24, 0
      %p124 = por %p122, %p123
      %s125 = ssub.s32 %s26, %s40
      %s126 = ssub.s32 %s27, %s36
      %s127 = sor.u32 %s125, %s126
      %p128 = scmp.eq.s32.totalorder %s127, 0
      %s130 = sadd.s32 %s129, 1
      %s131 = scalar_select %p128, %s129, %s130
      %p134 = pneg %p128
      %p135 = scmp.eq.s32.totalorder %s18, 1
      %p136 = por %p134, %p135
      %p137 = scmp.ne.s32.totalorder %s129, %s132
      %p138 = scmp.eq.s32.totalorder %s18, 0
      %p139 = por %p137, %p138
      %p140 = scmp.ne.s32.totalorder %s129, %s132
      %p141 = scmp.eq.s32.totalorder %s23, 1
      %p142 = por %p140, %p141
      %p143 = scmp.ne.s32.totalorder %s132, %s133
      %p144 = scmp.eq.s32.totalorder %s23, 0
      %p145 = por %p143, %p144
      %p146 = scmp.ne.s32.totalorder %s132, %s133
      %p147 = scmp.eq.s32.totalorder %s24, 1
      %p148 = por %p146, %p147
      %p150 = scmp.ne.s32.totalorder %s133, %s149
      %p151 = scmp.eq.s32.totalorder %s24, 0
      %p152 = por %p150, %p151
      %s153 = ssub.s32 %s25, %s44
      %s154 = ssub.s32 %s26, %s40
      %s155 = sor.u32 %s153, %s154
      %s156 = ssub.s32 %s27, %s36
      %s157 = sor.u32 %s155, %s156
      %p158 = scmp.eq.s32.totalorder %s157, 0
      %s160 = sadd.s32 %s159, 1
      %s161 = scalar_select %p158, %s159, %s160
      %p164 = pneg %p158
      %p165 = scmp.eq.s32.totalorder %s18, 1
      %p166 = por %p164, %p165
      %p167 = scmp.ne.s32.totalorder %s159, %s162
      %p168 = scmp.eq.s32.totalorder %s18, 0
      %p169 = por %p167, %p168
      %p170 = scmp.ne.s32.totalorder %s159, %s162
      %p171 = scmp.eq.s32.totalorder %s23, 1
      %p172 = por %p170, %p171
      %p173 = scmp.ne.s32.totalorder %s162, %s163
      %p174 = scmp.eq.s32.totalorder %s23, 0
      %p175 = por %p173, %p174
      %p176 = scmp.ne.s32.totalorder %s162, %s163
      %p177 = scmp.eq.s32.totalorder %s24, 1
      %p178 = por %p176, %p177
      %p180 = scmp.ne.s32.totalorder %s163, %s179
      %p181 = scmp.eq.s32.totalorder %s24, 0
      %p182 = por %p180, %p181
      %p183 = scmp.le.s32.totalorder 1, %s18
      %p184 = scmp.lt.s32.totalorder %s18, 3
      %p185 = pnand %p183, %p184
      %p186 = pneg %p185
      // Predicated region
      $region9: #{encoder_prenet_forward.3} parent=5 // pred_check
        _
      $region10: #{encoder_prenet_forward.3} parent=5 // pred_check_branch
        %188 = sbr.rel (%p185) target = $region12
      $region11: #{encoder_prenet_forward.3} parent=5 // pred_region
        %s189 = ssub.s32 %s18, 1
        // Predicated region
        $region13: #{encoder_prenet_forward.3} parent=11 // pred_check
          %p190 = pneg %p91
        $region14: #{encoder_prenet_forward.3} parent=11 // pred_check_branch
          %192 = sbr.rel (%p190) target = $region16
        $region15: #{encoder_prenet_forward.3} parent=11 // pred_region
          %s194 = ssub.s32 128, 128
          %195 = vsyncadd [#allocation6], %s194
          %s196 = smul.addr %s30, 64
          %s197 = scalar_lea.hbm %s1, %s196
          %s198 = sshll.u32 [#allocation5], 4
          %s199 = int_to_ptr.vmem [resolvable:$true] %s198
          %204 = dma.hbm_to_vmem [thread:$0]  %s197, 128, %s199, [#allocation6], 64, 64, 4
        $region16: #{encoder_prenet_forward.3} parent=11 // pred_fallthru
          _
        // Predicated region
        $region17: #{encoder_prenet_forward.3} parent=11 // pred_check
          %p205 = pneg %p117
        $region18: #{encoder_prenet_forward.3} parent=11 // pred_check_branch
          %207 = sbr.rel (%p205) target = $region20
        $region19: #{encoder_prenet_forward.3} parent=11 // pred_region
          %s209 = ssub.s32 16, 16
          %210 = vsyncadd [#allocation6], %s209
          %s211 = smul.addr %s30, 16
          %s212 = scalar_lea.hbm %s2, %s211
          %s214 = sshll.u32 [#allocation7], 4
          %s215 = int_to_ptr.vmem [resolvable:$true] %s214
          %217 = dma.hbm_to_vmem [thread:$0]  %s212, 16, %s215, [#allocation6]
        $region20: #{encoder_prenet_forward.3} parent=11 // pred_fallthru
          _
        // Predicated region
        $region21: #{encoder_prenet_forward.3} parent=11 // pred_check
          %p218 = pneg %p145
        $region22: #{encoder_prenet_forward.3} parent=11 // pred_check_branch
          %220 = sbr.rel (%p218) target = $region24
        $region23: #{encoder_prenet_forward.3} parent=11 // pred_region
          %s221 = smul.u32 2, %s29
          %s223 = ssub.s32 256, 256
          %224 = vsyncadd [#allocation9], %s223
          %s225 = sadd.s32 %s30, %s221
          %s226 = smul.addr %s225, 128
          %s227 = scalar_lea.hbm %s3, %s226
          %s228 = sshll.u32 [#allocation8], 4
          %s229 = int_to_ptr.vmem [resolvable:$true] %s228
          %234 = dma.hbm_to_vmem [thread:$0]  %s227, 256, %s229, [#allocation9], 128, 128, 8
        $region24: #{encoder_prenet_forward.3} parent=11 // pred_fallthru
          _
      $region12: #{encoder_prenet_forward.3} parent=5 // pred_fallthru
        _
      %p235 = scmp.lt.s32.totalorder %s18, 2
      // Predicated region
      $region25: #{encoder_prenet_forward.3} parent=5 // pred_check
        %p236 = pneg %p235
      $region26: #{encoder_prenet_forward.3} parent=5 // pred_check_branch
        %238 = sbr.rel (%p236) target = $region28
      $region27: #{encoder_prenet_forward.3} parent=5 // pred_region
        // Predicated region
        $region29: #{encoder_prenet_forward.3} parent=27 // pred_check
          %p239 = pneg %p59
        $region30: #{encoder_prenet_forward.3} parent=27 // pred_check_branch
          %241 = sbr.rel (%p239) target = $region32
        $region31: #{encoder_prenet_forward.3} parent=27 // pred_region
          %s242 = sand.u32 %s49, 1
          %s243 = scalar_lea.sflag [#allocation3], %s242
          %s244 = sand.u32 %s49, 1
          %s245 = smul.addr %s244, 8
          %s246 = scalar_lea.vmem [#allocation2], %s245
          %s247 = smul.u32 2, %s26
          %s249 = ssub.s32 128, 128
          %250 = vsyncadd %s243, %s249
          %s251 = smul.addr %s25, 2
          %s252 = sadd.s32 %s247, %s251
          %s253 = smul.addr %s252, 64
          %s254 = scalar_lea.hbm %s0, %s253
          %s255 = sshll.u32 %s246, 4
          %s256 = int_to_ptr.vmem [resolvable:$true] %s255
          %261 = dma.hbm_to_vmem [thread:$0]  %s254, 128, %s256, %s243, 64, 64, 4
        $region32: #{encoder_prenet_forward.3} parent=27 // pred_fallthru
          _
      $region28: #{encoder_prenet_forward.3} parent=5 // pred_fallthru
        _
      %p262 = scmp.le.s32.totalorder 1, %s18
      %p263 = scmp.lt.s32.totalorder %s18, 3
      %p264 = pnand %p262, %p263
      %p265 = pneg %p264
      // Predicated region
      $region33: #{encoder_prenet_forward.3} parent=5 // pred_check
        _
      $region34: #{encoder_prenet_forward.3} parent=5 // pred_check_branch
        %267 = sbr.rel (%p264) target = $region36
      $region35: #{encoder_prenet_forward.3} parent=5 // pred_region
        %s268 = ssub.s32 %s18, 1
        %s269 = sand.u32 %s52, 1
        %s270 = scalar_lea.sflag [#allocation3], %s269
        %s271 = sand.u32 %s52, 1
        %s272 = smul.addr %s271, 8
        %s273 = scalar_lea.vmem [#allocation2], %s272
        // Predicated region
        $region37: #{encoder_prenet_forward.3} parent=35 // pred_check
          %p274 = pneg %p65
        $region38: #{encoder_prenet_forward.3} parent=35 // pred_check_branch
          %276 = sbr.rel (%p274) target = $region40
        $region39: #{encoder_prenet_forward.3} parent=35 // pred_region
          %277 = dma.done %s270, 128
        $region40: #{encoder_prenet_forward.3} parent=35 // pred_fallthru
          _
        // Predicated region
        $region41: #{encoder_prenet_forward.3} parent=35 // pred_check
          %p278 = pneg %p91
        $region42: #{encoder_prenet_forward.3} parent=35 // pred_check_branch
          %280 = sbr.rel (%p278) target = $region44
        $region43: #{encoder_prenet_forward.3} parent=35 // pred_region
          %281 = dma.done [#allocation6], 128
        $region44: #{encoder_prenet_forward.3} parent=35 // pred_fallthru
          _
        // Predicated region
        $region45: #{encoder_prenet_forward.3} parent=35 // pred_check
          %p282 = pneg %p117
        $region46: #{encoder_prenet_forward.3} parent=35 // pred_check_branch
          %284 = sbr.rel (%p282) target = $region48
        $region47: #{encoder_prenet_forward.3} parent=35 // pred_region
          %285 = dma.done [#allocation6], 16
        $region48: #{encoder_prenet_forward.3} parent=35 // pred_fallthru
          _
        // Predicated region
        $region49: #{encoder_prenet_forward.3} parent=35 // pred_check
          %p286 = pneg %p145
        $region50: #{encoder_prenet_forward.3} parent=35 // pred_check_branch
          %288 = sbr.rel (%p286) target = $region52
        $region51: #{encoder_prenet_forward.3} parent=35 // pred_region
          %289 = dma.done [#allocation9], 256
        $region52: #{encoder_prenet_forward.3} parent=35 // pred_fallthru
          _
        %s290 = sand.u32 %s52, 1
        %s291 = scalar_lea.sflag [#allocation3], %s290
        %s292 = sand.u32 %s52, 1
        %s293 = smul.addr %s292, 8
        %s294 = scalar_lea.vmem [#allocation2], %s293
        %p295 = pneg %p65
        %p296 = pneg %p62
        %p297 = pneg %p91
        %p298 = pneg %p88
        %p299 = pneg %p117
        %p300 = pneg %p114
        %p301 = pneg %p145
        %p302 = pneg %p142
        %p303 = pneg %p175
        %p304 = pneg %p172
        %s305 = sand.u32 %s162, 1
        %s306 = scalar_lea.sflag [#allocation4], %s305
        %s307 = sand.u32 %s162, 1
        %s308 = smul.addr %s307, 16
        %s309 = scalar_lea.vmem [#allocation10], %s308
        %s310 = smul.u32 2, %s29
        %s311 = smul.u32 2, %s29
        %s312 = smul.u32 2, %s29
        %v314 = vld [vmem:[%s273] sm:$0xf]
        %v315 = vld [vmem:[%s273 + $0x4] sm:$0xf]
        %v316 = vld [vmem:[#allocation5] sm:$0xf]
        %v317 = vld [vmem:[#allocation5 + $0x4] sm:$0xf]
        %v318 = vld [vmem:[#allocation7] sm:$0x1]
        %v320 = vlaneseq
        %v321 = vshrl.u32 %v320, 7
        %v322 = vsub.s32 0, %v321
        %v323 = vrot.slane %v318, %v322
        %v327 = vunpack.c.l.b16 %v314
        %v328 = vunpack.c.l.b16 %v315
        %v329 = vpack.c.b16 %v328, %v327
        %v332 = vunpack.c.l.b16 %v316
        %v333 = vunpack.c.l.b16 %v317
        %v334 = vpack.c.b16 %v333, %v332
        %vm336 = vcmask 130048
        %v338 = vsel %vm336, %v329, 0
        %340 = vmatprep.subr.bf16.mxu0 0
        %341 = vmatpush1.bf16.msra.mxu0 %v334
        %342 = vmatprep.subr.bf16.mxu0 0
        %343 = vmatpush1.bf16.msra.mxu0 0
        %344 = vmatprep.subr.bf16.mxu0 0
        %345 = vmatpush1.bf16.msra.mxu0 0
        %346 = vmatprep.subr.bf16.mxu0 0
        %347 = vmatpush1.bf16.msra.mxu0 0
        %348 = vmatprep.subr.bf16.mxu0 0
        %349 = vmatpush1.bf16.msra.mxu0 0
        %350 = vmatprep.subr.bf16.mxu0 0
        %351 = vmatpush1.bf16.msra.mxu0 0
        %352 = vmatprep.subr.bf16.mxu0 0
        %353 = vmatpush1.bf16.msra.mxu0 0
        %354 = vmatprep.subr.bf16.mxu0 0
        %355 = vmatpush1.bf16.msra.mxu0 0
        %356 = vmatprep.subr.bf16.mxu0 0
        %357 = vmatpush1.bf16.msra.mxu0 0
        %358 = vmatprep.subr.bf16.mxu0 0
        %359 = vmatpush1.bf16.msra.mxu0 0
        %360 = vmatprep.subr.bf16.mxu0 0
        %361 = vmatpush1.bf16.msra.mxu0 0
        %362 = vmatprep.subr.bf16.mxu0 0
        %363 = vmatpush1.bf16.msra.mxu0 0
        %364 = vmatprep.subr.bf16.mxu0 0
        %365 = vmatpush1.bf16.msra.mxu0 0
        %366 = vmatprep.subr.bf16.mxu0 0
        %367 = vmatpush1.bf16.msra.mxu0 0
        %368 = vmatprep.subr.bf16.mxu0 0
        %369 = vmatpush1.bf16.msra.mxu0 0
        %370 = vmatprep.subr.bf16.mxu0 0
        %371 = vmatpush1.bf16.msra.mxu0 0
        %372 = vmatprep.mubr.bf16.mxu0 0
        %373 = vmatmul.mubr.bf16.gmra.mrb[0].mxu0 %v338
        %v374 = vpop.f32.mrb[0].mxu0
        %v375 = vadd.f32 %v323, %v374
        %v376 = vpop.f32.mrb[0].mxu0
        %v377 = vpop.f32.mrb[0].mxu0
        %v378 = vadd.f32 %v323, %v377
        %v379 = vpop.f32.mrb[0].mxu0
        %380 = vdwg.mxu0
        %v381 = vld [vmem:[#allocation8] sm:$0xff]
        %v382 = vld [vmem:[#allocation8 + $0x8] sm:$0xff]
        %v383 = vadd.f32 %v375, %v381
        %v384 = vadd.f32 %v378, %v382
        %vm385 = vcmask 261120
        %386 = vst.msk [vmem:[%s309] sm:$0xff] %vm385, %v383
        %387 = vst.msk [vmem:[%s309 + $0x8] sm:$0xff] %vm385, %v384
        %s388 = sand.u32 %s162, 1
        %s389 = scalar_lea.sflag [#allocation4], %s388
        %s390 = sand.u32 %s162, 1
        %s391 = smul.addr %s390, 16
        %s392 = scalar_lea.vmem [#allocation10], %s391
        // Predicated region
        $region53: #{encoder_prenet_forward.3} parent=35 // pred_check
          %p393 = pneg %p172
        $region54: #{encoder_prenet_forward.3} parent=35 // pred_check_branch
          %395 = sbr.rel (%p393) target = $region56
        $region55: #{encoder_prenet_forward.3} parent=35 // pred_region
          %s396 = smul.u32 2, %s29
          %s398 = ssub.s32 256, 256
          %399 = vsyncadd %s389, %s398
          %s400 = sadd.s32 %s30, %s396
          %s401 = smul.addr %s28, 2
          %s402 = sadd.s32 %s400, %s401
          %s403 = smul.addr %s402, 128
          %s404 = scalar_lea.hbm %s4, %s403
          %s405 = sshll.u32 %s392, 4
          %s406 = int_to_ptr.vmem [resolvable:$true] %s405
          %411 = dma.vmem_to_hbm [thread:$0]  %s406, 256, %s404, %s389, 128, 128, 8
        $region56: #{encoder_prenet_forward.3} parent=35 // pred_fallthru
          _
      $region36: #{encoder_prenet_forward.3} parent=5 // pred_fallthru
        _
      %p412 = scmp.le.s32.totalorder 2, %s18
      // Predicated region
      $region57: #{encoder_prenet_forward.3} parent=5 // pred_check
        %p413 = pneg %p412
      $region58: #{encoder_prenet_forward.3} parent=5 // pred_check_branch
        %415 = sbr.rel (%p413) target = $region60
      $region59: #{encoder_prenet_forward.3} parent=5 // pred_region
        %s416 = ssub.s32 %s18, 2
        // Predicated region
        $region61: #{encoder_prenet_forward.3} parent=59 // pred_check
          %p417 = pneg %p178
        $region62: #{encoder_prenet_forward.3} parent=59 // pred_check_branch
          %419 = sbr.rel (%p417) target = $region64
        $region63: #{encoder_prenet_forward.3} parent=59 // pred_region
          %s420 = sand.u32 %s163, 1
          %s421 = scalar_lea.sflag [#allocation4], %s420
          %s422 = sand.u32 %s163, 1
          %s423 = smul.addr %s422, 16
          %s424 = scalar_lea.vmem [#allocation10], %s423
          %425 = dma.done %s421, 256
        $region64: #{encoder_prenet_forward.3} parent=59 // pred_fallthru
          _
      $region60: #{encoder_prenet_forward.3} parent=5 // pred_fallthru
        _
    $region6: #{encoder_prenet_forward.3} parent=1 // loop_footer
      %s22 = sadd.s32 1, %s18
    $region7: #{encoder_prenet_forward.3} parent=1 // loop_footer_branch
      %17 = sbr.rel target = $region3
    $region8: #{encoder_prenet_forward.3} parent=1 // loop_exit
      _
    %426 = vsyncpa [#allocation3], 1
    %s427 = scalar_lea.sflag [#allocation3], 1
    %428 = vsyncpa %s427, 1
    %429 = vsyncpa [#allocation6], 1
    %430 = vsyncpa [#allocation9], 1
    %431 = vsyncpa [#allocation4], 1
    %s432 = scalar_lea.sflag [#allocation4], 1
    %433 = vsyncpa %s432, 1

// kernel: encoder_prenet_forward.2
$region0: #{encoder_prenet_forward.2}
  #allocation0 [shape = 'u32[]', space=smem, size = 0x4, offset = 0x4, fixed_abs, tag = 'smem constant byte address 0x4 - core index']
  #allocation1 [shape = 'u32[144,128]{1,0:T(1,128)}', space=vmem, size = 0x12000, scoped, tag = 'internal scratch']
  #allocation2 [shape = 'bf16[24,16]{1,0:T(8,128)(2,1)}', space=vmem, size = 0x1800, scoped, tag = 'scratch operand']
  %s0 = inlined_call_operand.hbm [shape: bf16[2,16,16], index: 0, kind: input, shape index: {}]
  %s1 = inlined_call_operand.hbm [shape: bf16[3,16,16], index: 1, kind: input, shape index: {}]
  %s2 = inlined_call_operand.hbm [shape: bf16[3,16,16], index: 2, kind: input, shape index: {}]
  %s3 = inlined_call_operand.hbm [shape: f32[1,16], index: 3, kind: input, shape index: {}]
  %s4 = inlined_call_operand.hbm [shape: f32[1,16], index: 4, kind: input, shape index: {}]
  %s5 = inlined_call_operand.hbm [shape: bf16[2,16,16], index: 5, kind: output, shape index: {}]
  %s6 = sld [smem:[#allocation0]]
  $region73: #{encoder_prenet_forward.2} parent=0
    _
  %s8 = ssub.s32 1, %s6
  %s9 = scalar_select 0, %s8, %s6
  $region1: #{encoder_prenet_forward.2} parent=0
    #allocation3 [shape = 'u8[8192]{0}', space=vmem, size = 0x2000, scoped, tag = 'input window, operand 0']
    #allocation4 [shape = 's32[2]{0}', space=sflag, size = 0x8, scoped, tag = 'scoped memory for encoder_prenet_forward.2']
    #allocation5 [shape = 's32[2]{0}', space=sflag, size = 0x8, scoped, tag = 'scoped memory for encoder_prenet_forward.2']
    #allocation6 [shape = 'u8[12288]{0}', space=vmem, size = 0x3000, scoped, tag = 'input window, operand 1, single buffered']
    #allocation7 [shape = 's32[1]{0}', space=sflag, size = 0x4, scoped, tag = 'scoped memory for encoder_prenet_forward.2']
    #allocation8 [shape = 'u8[12288]{0}', space=vmem, size = 0x3000, scoped, tag = 'input window, operand 2, single buffered']
    #allocation9 [shape = 'u8[512]{0}', space=vmem, size = 0x400, scoped, tag = 'input window, operand 3, single buffered']
    #allocation10 [shape = 's32[1]{0}', space=sflag, size = 0x4, scoped, tag = 'scoped memory for encoder_prenet_forward.2']
    #allocation11 [shape = 'u8[512]{0}', space=vmem, size = 0x400, scoped, tag = 'input window, operand 4, single buffered']
    #allocation12 [shape = 'u8[8192]{0}', space=vmem, size = 0x2000, scoped, tag = 'output window, operand 0']
    %10 = vsyncpa [#allocation4], 0
    %s11 = scalar_lea.sflag [#allocation4], 1
    %12 = vsyncpa %s11, 0
    %13 = vsyncpa [#allocation7], 0
    %14 = vsyncpa [#allocation10], 0
    %15 = vsyncpa [#allocation5], 0
    %s16 = scalar_lea.sflag [#allocation5], 1
    %17 = vsyncpa %s16, 0
    loop: start=0, step=1, limit=4
    $region2: #{encoder_prenet_forward.2} parent=1 // loop_pre_header
      _
    $region3: #{encoder_prenet_forward.2} parent=1 // loop_header
      %s19 = sphi 0, %s23
      %p20 = scmp.ge.s32.totalorder %s19, 4
      %s29 = sphi 0, %s31
      %s32 = sphi 0, %s29
      %s33 = sphi 0, %s32
      %s49 = sphi 0, %s33
      %s53 = sphi 0, %s53
      %s55 = sphi 0, %s53
      %s56 = sphi 0, %s55
      %s70 = sphi 0, %s56
      %s74 = sphi 0, %s74
      %s76 = sphi 0, %s74
      %s77 = sphi 0, %s76
      %s91 = sphi 0, %s77
      %s95 = sphi 0, %s95
      %s97 = sphi 0, %s95
      %s98 = sphi 0, %s97
      %s112 = sphi 0, %s98
      %s116 = sphi 0, %s116
      %s118 = sphi 0, %s116
      %s119 = sphi 0, %s118
      %s133 = sphi 0, %s119
      %s139 = sphi 0, %s141
      %s142 = sphi 0, %s139
      %s143 = sphi 0, %s142
      %s159 = sphi 0, %s143
    $region4: #{encoder_prenet_forward.2} parent=1 // loop_header_branch
      %22 = sbr.rel (%p20) target = $region8
    $region5: #{encoder_prenet_forward.2} parent=1 // loop_body
      %s24 = ssub.s32 %s19, 1
      %s25 = ssub.s32 %s19, 2
      %s26 = sadd.s32 %s19, 1
      %s27 = ssub.s32 %s19, %s26
      %p28 = scmp.eq.s32.totalorder %s27, 0
      %s30 = sadd.s32 %s29, 1
      %s31 = scalar_select %p28, %s29, %s30
      %p34 = pneg %p28
      %p35 = scmp.eq.s32.totalorder %s19, 1
      %p36 = por %p34, %p35
      %p37 = scmp.ne.s32.totalorder %s29, %s32
      %p38 = scmp.eq.s32.totalorder %s19, 0
      %p39 = por %p37, %p38
      %p40 = scmp.ne.s32.totalorder %s29, %s32
      %p41 = scmp.eq.s32.totalorder %s24, 1
      %p42 = por %p40, %p41
      %p43 = scmp.ne.s32.totalorder %s32, %s33
      %p44 = scmp.eq.s32.totalorder %s24, 0
      %p45 = por %p43, %p44
      %p46 = scmp.ne.s32.totalorder %s32, %s33
      %p47 = scmp.eq.s32.totalorder %s25, 1
      %p48 = por %p46, %p47
      %p50 = scmp.ne.s32.totalorder %s33, %s49
      %p51 = scmp.eq.s32.totalorder %s25, 0
      %p52 = por %p50, %p51
      %s54 = sadd.s32 %s53, 1
      %p57 = scmp.eq.s32.totalorder %s19, 1
      %p58 = scmp.ne.s32.totalorder %s53, %s55
      %p59 = scmp.eq.s32.totalorder %s19, 0
      %p60 = por %p58, %p59
      %p61 = scmp.ne.s32.totalorder %s53, %s55
      %p62 = scmp.eq.s32.totalorder %s24, 1
      %p63 = por %p61, %p62
      %p64 = scmp.ne.s32.totalorder %s55, %s56
      %p65 = scmp.eq.s32.totalorder %s24, 0
      %p66 = por %p64, %p65
      %p67 = scmp.ne.s32.totalorder %s55, %s56
      %p68 = scmp.eq.s32.totalorder %s25, 1
      %p69 = por %p67, %p68
      %p71 = scmp.ne.s32.totalorder %s56, %s70
      %p72 = scmp.eq.s32.totalorder %s25, 0
      %p73 = por %p71, %p72
      %s75 = sadd.s32 %s74, 1
      %p78 = scmp.eq.s32.totalorder %s19, 1
      %p79 = scmp.ne.s32.totalorder %s74, %s76
      %p80 = scmp.eq.s32.totalorder %s19, 0
      %p81 = por %p79, %p80
      %p82 = scmp.ne.s32.totalorder %s74, %s76
      %p83 = scmp.eq.s32.totalorder %s24, 1
      %p84 = por %p82, %p83
      %p85 = scmp.ne.s32.totalorder %s76, %s77
      %p86 = scmp.eq.s32.totalorder %s24, 0
      %p87 = por %p85, %p86
      %p88 = scmp.ne.s32.totalorder %s76, %s77
      %p89 = scmp.eq.s32.totalorder %s25, 1
      %p90 = por %p88, %p89
      %p92 = scmp.ne.s32.totalorder %s77, %s91
      %p93 = scmp.eq.s32.totalorder %s25, 0
      %p94 = por %p92, %p93
      %s96 = sadd.s32 %s95, 1
      %p99 = scmp.eq.s32.totalorder %s19, 1
      %p100 = scmp.ne.s32.totalorder %s95, %s97
      %p101 = scmp.eq.s32.totalorder %s19, 0
      %p102 = por %p100, %p101
      %p103 = scmp.ne.s32.totalorder %s95, %s97
      %p104 = scmp.eq.s32.totalorder %s24, 1
      %p105 = por %p103, %p104
      %p106 = scmp.ne.s32.totalorder %s97, %s98
      %p107 = scmp.eq.s32.totalorder %s24, 0
      %p108 = por %p106, %p107
      %p109 = scmp.ne.s32.totalorder %s97, %s98
      %p110 = scmp.eq.s32.totalorder %s25, 1
      %p111 = por %p109, %p110
      %p113 = scmp.ne.s32.totalorder %s98, %s112
      %p114 = scmp.eq.s32.totalorder %s25, 0
      %p115 = por %p113, %p114
      %s117 = sadd.s32 %s116, 1
      %p120 = scmp.eq.s32.totalorder %s19, 1
      %p121 = scmp.ne.s32.totalorder %s116, %s118
      %p122 = scmp.eq.s32.totalorder %s19, 0
      %p123 = por %p121, %p122
      %p124 = scmp.ne.s32.totalorder %s116, %s118
      %p125 = scmp.eq.s32.totalorder %s24, 1
      %p126 = por %p124, %p125
      %p127 = scmp.ne.s32.totalorder %s118, %s119
      %p128 = scmp.eq.s32.totalorder %s24, 0
      %p129 = por %p127, %p128
      %p130 = scmp.ne.s32.totalorder %s118, %s119
      %p131 = scmp.eq.s32.totalorder %s25, 1
      %p132 = por %p130, %p131
      %p134 = scmp.ne.s32.totalorder %s119, %s133
      %p135 = scmp.eq.s32.totalorder %s25, 0
      %p136 = por %p134, %p135
      %s137 = ssub.s32 %s19, %s26
      %p138 = scmp.eq.s32.totalorder %s137, 0
      %s140 = sadd.s32 %s139, 1
      %s141 = scalar_select %p138, %s139, %s140
      %p144 = pneg %p138
      %p145 = scmp.eq.s32.totalorder %s19, 1
      %p146 = por %p144, %p145
      %p147 = scmp.ne.s32.totalorder %s139, %s142
      %p148 = scmp.eq.s32.totalorder %s19, 0
      %p149 = por %p147, %p148
      %p150 = scmp.ne.s32.totalorder %s139, %s142
      %p151 = scmp.eq.s32.totalorder %s24, 1
      %p152 = por %p150, %p151
      %p153 = scmp.ne.s32.totalorder %s142, %s143
      %p154 = scmp.eq.s32.totalorder %s24, 0
      %p155 = por %p153, %p154
      %p156 = scmp.ne.s32.totalorder %s142, %s143
      %p157 = scmp.eq.s32.totalorder %s25, 1
      %p158 = por %p156, %p157
      %p160 = scmp.ne.s32.totalorder %s143, %s159
      %p161 = scmp.eq.s32.totalorder %s25, 0
      %p162 = por %p160, %p161
      %p163 = scmp.le.s32.totalorder 1, %s19
      %p164 = scmp.lt.s32.totalorder %s19, 3
      %p165 = pnand %p163, %p164
      %p166 = pneg %p165
      // Predicated region
      $region9: #{encoder_prenet_forward.2} parent=5 // pred_check
        _
      $region10: #{encoder_prenet_forward.2} parent=5 // pred_check_branch
        %168 = sbr.rel (%p165) target = $region12
      $region11: #{encoder_prenet_forward.2} parent=5 // pred_region
        %s169 = ssub.s32 %s19, 1
        // Predicated region
        $region13: #{encoder_prenet_forward.2} parent=11 // pred_check
          %p170 = pneg %p66
        $region14: #{encoder_prenet_forward.2} parent=11 // pred_check_branch
          %172 = sbr.rel (%p170) target = $region16
        $region15: #{encoder_prenet_forward.2} parent=11 // pred_region
          %s174 = ssub.s32 384, 384
          %175 = vsyncadd [#allocation7], %s174
          %s176 = sshll.u32 [#allocation6], 4
          %s177 = int_to_ptr.vmem [resolvable:$true] %s176
          %182 = dma.hbm_to_vmem [thread:$0]  %s1, 384, %s177, [#allocation7], 64, 64, 4
        $region16: #{encoder_prenet_forward.2} parent=11 // pred_fallthru
          _
        // Predicated region
        $region17: #{encoder_prenet_forward.2} parent=11 // pred_check
          %p183 = pneg %p87
        $region18: #{encoder_prenet_forward.2} parent=11 // pred_check_branch
          %185 = sbr.rel (%p183) target = $region20
        $region19: #{encoder_prenet_forward.2} parent=11 // pred_region
          %s187 = ssub.s32 384, 384
          %188 = vsyncadd [#allocation7], %s187
          %s189 = sshll.u32 [#allocation8], 4
          %s190 = int_to_ptr.vmem [resolvable:$true] %s189
          %195 = dma.hbm_to_vmem [thread:$0]  %s2, 384, %s190, [#allocation7], 64, 64, 4
        $region20: #{encoder_prenet_forward.2} parent=11 // pred_fallthru
          _
        // Predicated region
        $region21: #{encoder_prenet_forward.2} parent=11 // pred_check
          %p196 = pneg %p108
        $region22: #{encoder_prenet_forward.2} parent=11 // pred_check_branch
          %198 = sbr.rel (%p196) target = $region24
        $region23: #{encoder_prenet_forward.2} parent=11 // pred_region
          %s200 = ssub.s32 16, 16
          %201 = vsyncadd [#allocation10], %s200
          %s203 = sshll.u32 [#allocation9], 4
          %s204 = int_to_ptr.vmem [resolvable:$true] %s203
          %206 = dma.hbm_to_vmem [thread:$0]  %s3, 16, %s204, [#allocation10]
        $region24: #{encoder_prenet_forward.2} parent=11 // pred_fallthru
          _
        // Predicated region
        $region25: #{encoder_prenet_forward.2} parent=11 // pred_check
          %p207 = pneg %p129
        $region26: #{encoder_prenet_forward.2} parent=11 // pred_check_branch
          %209 = sbr.rel (%p207) target = $region28
        $region27: #{encoder_prenet_forward.2} parent=11 // pred_region
          %s211 = ssub.s32 16, 16
          %212 = vsyncadd [#allocation10], %s211
          %s214 = sshll.u32 [#allocation11], 4
          %s215 = int_to_ptr.vmem [resolvable:$true] %s214
          %217 = dma.hbm_to_vmem [thread:$0]  %s4, 16, %s215, [#allocation10]
        $region28: #{encoder_prenet_forward.2} parent=11 // pred_fallthru
          _
      $region12: #{encoder_prenet_forward.2} parent=5 // pred_fallthru
        _
      %p218 = scmp.lt.s32.totalorder %s19, 2
      // Predicated region
      $region29: #{encoder_prenet_forward.2} parent=5 // pred_check
        %p219 = pneg %p218
      $region30: #{encoder_prenet_forward.2} parent=5 // pred_check_branch
        %221 = sbr.rel (%p219) target = $region32
      $region31: #{encoder_prenet_forward.2} parent=5 // pred_region
        // Predicated region
        $region33: #{encoder_prenet_forward.2} parent=31 // pred_check
          %p222 = pneg %p39
        $region34: #{encoder_prenet_forward.2} parent=31 // pred_check_branch
          %224 = sbr.rel (%p222) target = $region36
        $region35: #{encoder_prenet_forward.2} parent=31 // pred_region
          %s225 = sand.u32 %s29, 1
          %s226 = scalar_lea.sflag [#allocation4], %s225
          %s227 = sand.u32 %s29, 1
          %s228 = smul.addr %s227, 8
          %s229 = scalar_lea.vmem [#allocation3], %s228
          %s231 = ssub.s32 128, 128
          %232 = vsyncadd %s226, %s231
          %s233 = smul.addr %s19, 2
          %s234 = smul.addr %s233, 64
          %s235 = scalar_lea.hbm %s0, %s234
          %s236 = sshll.u32 %s229, 4
          %s237 = int_to_ptr.vmem [resolvable:$true] %s236
          %242 = dma.hbm_to_vmem [thread:$0]  %s235, 128, %s237, %s226, 64, 64, 4
        $region36: #{encoder_prenet_forward.2} parent=31 // pred_fallthru
          _
      $region32: #{encoder_prenet_forward.2} parent=5 // pred_fallthru
        _
      %p243 = scmp.le.s32.totalorder 1, %s19
      %p244 = scmp.lt.s32.totalorder %s19, 3
      %p245 = pnand %p243, %p244
      %p246 = pneg %p245
      // Predicated region
      $region37: #{encoder_prenet_forward.2} parent=5 // pred_check
        _
      $region38: #{encoder_prenet_forward.2} parent=5 // pred_check_branch
        %248 = sbr.rel (%p245) target = $region40
      $region39: #{encoder_prenet_forward.2} parent=5 // pred_region
        %s249 = ssub.s32 %s19, 1
        %s250 = sand.u32 %s32, 1
        %s251 = scalar_lea.sflag [#allocation4], %s250
        %s252 = sand.u32 %s32, 1
        %s253 = smul.addr %s252, 8
        %s254 = scalar_lea.vmem [#allocation3], %s253
        // Predicated region
        $region41: #{encoder_prenet_forward.2} parent=39 // pred_check
          %p255 = pneg %p45
        $region42: #{encoder_prenet_forward.2} parent=39 // pred_check_branch
          %257 = sbr.rel (%p255) target = $region44
        $region43: #{encoder_prenet_forward.2} parent=39 // pred_region
          %258 = dma.done %s251, 128
        $region44: #{encoder_prenet_forward.2} parent=39 // pred_fallthru
          _
        // Predicated region
        $region45: #{encoder_prenet_forward.2} parent=39 // pred_check
          %p259 = pneg %p66
        $region46: #{encoder_prenet_forward.2} parent=39 // pred_check_branch
          %261 = sbr.rel (%p259) target = $region48
        $region47: #{encoder_prenet_forward.2} parent=39 // pred_region
          %262 = dma.done [#allocation7], 384
        $region48: #{encoder_prenet_forward.2} parent=39 // pred_fallthru
          _
        // Predicated region
        $region49: #{encoder_prenet_forward.2} parent=39 // pred_check
          %p263 = pneg %p87
        $region50: #{encoder_prenet_forward.2} parent=39 // pred_check_branch
          %265 = sbr.rel (%p263) target = $region52
        $region51: #{encoder_prenet_forward.2} parent=39 // pred_region
          %266 = dma.done [#allocation7], 384
        $region52: #{encoder_prenet_forward.2} parent=39 // pred_fallthru
          _
        // Predicated region
        $region53: #{encoder_prenet_forward.2} parent=39 // pred_check
          %p267 = pneg %p108
        $region54: #{encoder_prenet_forward.2} parent=39 // pred_check_branch
          %269 = sbr.rel (%p267) target = $region56
        $region55: #{encoder_prenet_forward.2} parent=39 // pred_region
          %270 = dma.done [#allocation10], 16
        $region56: #{encoder_prenet_forward.2} parent=39 // pred_fallthru
          _
        // Predicated region
        $region57: #{encoder_prenet_forward.2} parent=39 // pred_check
          %p271 = pneg %p129
        $region58: #{encoder_prenet_forward.2} parent=39 // pred_check_branch
          %273 = sbr.rel (%p271) target = $region60
        $region59: #{encoder_prenet_forward.2} parent=39 // pred_region
          %274 = dma.done [#allocation10], 16
        $region60: #{encoder_prenet_forward.2} parent=39 // pred_fallthru
          _
        %s275 = sand.u32 %s32, 1
        %s276 = scalar_lea.sflag [#allocation4], %s275
        %s277 = sand.u32 %s32, 1
        %s278 = smul.addr %s277, 8
        %s279 = scalar_lea.vmem [#allocation3], %s278
        %p280 = pneg %p45
        %p281 = pneg %p42
        %p282 = pneg %p66
        %p283 = pneg %p63
        %p284 = pneg %p87
        %p285 = pneg %p84
        %p286 = pneg %p108
        %p287 = pneg %p105
        %p288 = pneg %p129
        %p289 = pneg %p126
        %p290 = pneg %p155
        %p291 = pneg %p152
        %s292 = sand.u32 %s142, 1
        %s293 = scalar_lea.sflag [#allocation5], %s292
        %s294 = sand.u32 %s142, 1
        %s295 = smul.addr %s294, 8
        %s296 = scalar_lea.vmem [#allocation12], %s295
        %vm298 = vcmask 125952
        %299 = vst.msk [vmem:[#allocation2 + $0x8] sm:$0xf] %vm298, 0
        %v300 = vld [vmem:[%s254] sm:$0xf]
        %v301 = vld [vmem:[%s254 + $0x4] sm:$0xf]
        %302 = vst.msk [vmem:[#allocation2] sm:$0xf] %vm298, %v300
        %303 = vst.msk [vmem:[#allocation2 + $0x4] sm:$0xf] %vm298, %v301
        %v304 = vld [vmem:[#allocation2] sm:$0xf]
        %v305 = vld [vmem:[#allocation2 + $0x4] sm:$0xf]
        %v306 = vld [vmem:[#allocation2 + $0x8] sm:$0xf]
        %v307 = vld [vmem:[#allocation6] sm:$0xf]
        %v308 = vld [vmem:[#allocation6 + $0x4] sm:$0xf]
        %v312 = vunpack.c.l.b16 %v304
        %v313 = vunpack.c.l.b16 %v305
        %v314 = vunpack.c.l.b16 %v306
        %v315 = vpack.c.b16 %v313, %v312
        %v316 = vpack.c.b16 %v314, %v314
        %v319 = vunpack.c.l.b16 %v307
        %v320 = vunpack.c.l.b16 %v308
        %v321 = vpack.c.b16 %v320, %v319
        %vm323 = vcmask 130048
        %v325 = vsel %vm323, %v315, 0
        %v328 = vsel %vm323, %v316, 0
        %330 = vmatprep.subr.bf16.mxu0 0
        %331 = vmatpush1.bf16.msra.mxu0 %v321
        %332 = vmatprep.subr.bf16.mxu0 0
        %333 = vmatpush1.bf16.msra.mxu0 0
        %334 = vmatprep.subr.bf16.mxu0 0
        %335 = vmatpush1.bf16.msra.mxu0 0
        %336 = vmatprep.subr.bf16.mxu0 0
        %337 = vmatpush1.bf16.msra.mxu0 0
        %338 = vmatprep.subr.bf16.mxu0 0
        %339 = vmatpush1.bf16.msra.mxu0 0
        %340 = vmatprep.subr.bf16.mxu0 0
        %341 = vmatpush1.bf16.msra.mxu0 0
        %342 = vmatprep.subr.bf16.mxu0 0
        %343 = vmatpush1.bf16.msra.mxu0 0
        %344 = vmatprep.subr.bf16.mxu0 0
        %345 = vmatpush1.bf16.msra.mxu0 0
        %346 = vmatprep.subr.bf16.mxu0 0
        %347 = vmatpush1.bf16.msra.mxu0 0
        %348 = vmatprep.subr.bf16.mxu0 0
        %349 = vmatpush1.bf16.msra.mxu0 0
        %350 = vmatprep.subr.bf16.mxu0 0
        %351 = vmatpush1.bf16.msra.mxu0 0
        %352 = vmatprep.subr.bf16.mxu0 0
        %353 = vmatpush1.bf16.msra.mxu0 0
        %354 = vmatprep.subr.bf16.mxu0 0
        %355 = vmatpush1.bf16.msra.mxu0 0
        %356 = vmatprep.subr.bf16.mxu0 0
        %357 = vmatpush1.bf16.msra.mxu0 0
        %358 = vmatprep.subr.bf16.mxu0 0
        %359 = vmatpush1.bf16.msra.mxu0 0
        %360 = vmatprep.subr.bf16.mxu0 0
        %361 = vmatpush1.bf16.msra.mxu0 0
        %362 = vmatprep.mubr.bf16.mxu0 0
        %363 = vmatmul.mubr.bf16.gmra.mrb[0].mxu0 %v325
        %v364 = vpop.f32.mrb[0].mxu0
        %v365 = vadd.f32 0.0, %v364
        %v366 = vpop.f32.mrb[0].mxu0
        %v367 = vpop.f32.mrb[0].mxu0
        %v368 = vadd.f32 0.0, %v367
        %v369 = vpop.f32.mrb[0].mxu0
        %370 = vmatprep.mubr.bf16.mxu0 0
        %371 = vmatmul.mubr.bf16.gmra.mrb[0].mxu0 %v328
        %v372 = vpop.f32.mrb[0].mxu0
        %v373 = vadd.f32 0.0, %v372
        %v374 = vpop.f32.mrb[0].mxu0
        %v375 = vpop.f32.mrb[0].mxu0
        %v376 = vpop.f32.mrb[0].mxu0
        %377 = vdwg.mxu0
        %v378 = vrot.slane %v365, 7
        %v379 = vrot.slane %v368, 7
        %v380 = vrot.slane %v373, 7
        %v381 = vlaneseq
        %v382 = vshrl.u32 %v381, 7
        %vm383 = vcmp.lt.s32.totalorder %v382, 1
        %v384 = vsel %vm383, %v378, %v379
        %v385 = vsel %vm383, %v380, %v378
        %v386 = vadd.f32 %v385, 0.0
        %v387 = vadd.f32 %v384, 0.0
        %s388 = scalar_lea.vmem [#allocation6], 8
        %v389 = vld [vmem:[%s388] sm:$0xf]
        %v390 = vld [vmem:[%s388 + $0x4] sm:$0xf]
        %v393 = vunpack.c.l.b16 %v389
        %v394 = vunpack.c.l.b16 %v390
        %v395 = vpack.c.b16 %v394, %v393
        %397 = vmatprep.subr.bf16.mxu0 0
        %398 = vmatpush1.bf16.msra.mxu0 %v395
        %399 = vmatprep.subr.bf16.mxu0 0
        %400 = vmatpush1.bf16.msra.mxu0 0
        %401 = vmatprep.subr.bf16.mxu0 0
        %402 = vmatpush1.bf16.msra.mxu0 0
        %403 = vmatprep.subr.bf16.mxu0 0
        %404 = vmatpush1.bf16.msra.mxu0 0
        %405 = vmatprep.subr.bf16.mxu0 0
        %406 = vmatpush1.bf16.msra.mxu0 0
        %407 = vmatprep.subr.bf16.mxu0 0
        %408 = vmatpush1.bf16.msra.mxu0 0
        %409 = vmatprep.subr.bf16.mxu0 0
        %410 = vmatpush1.bf16.msra.mxu0 0
        %411 = vmatprep.subr.bf16.mxu0 0
        %412 = vmatpush1.bf16.msra.mxu0 0
        %413 = vmatprep.subr.bf16.mxu0 0
        %414 = vmatpush1.bf16.msra.mxu0 0
        %415 = vmatprep.subr.bf16.mxu0 0
        %416 = vmatpush1.bf16.msra.mxu0 0
        %417 = vmatprep.subr.bf16.mxu0 0
        %418 = vmatpush1.bf16.msra.mxu0 0
        %419 = vmatprep.subr.bf16.mxu0 0
        %420 = vmatpush1.bf16.msra.mxu0 0
        %421 = vmatprep.subr.bf16.mxu0 0
        %422 = vmatpush1.bf16.msra.mxu0 0
        %423 = vmatprep.subr.bf16.mxu0 0
        %424 = vmatpush1.bf16.msra.mxu0 0
        %425 = vmatprep.subr.bf16.mxu0 0
        %426 = vmatpush1.bf16.msra.mxu0 0
        %427 = vmatprep.subr.bf16.mxu0 0
        %428 = vmatpush1.bf16.msra.mxu0 0
        %429 = vmatprep.mubr.bf16.mxu0 0
        %430 = vmatmul.mubr.bf16.gmra.mrb[0].mxu0 %v325
        %v431 = vpop.f32.mrb[0].mxu0
        %v432 = vadd.f32 0.0, %v431
        %v433 = vpop.f32.mrb[0].mxu0
        %v434 = vpop.f32.mrb[0].mxu0
        %v435 = vadd.f32 0.0, %v434
        %v436 = vpop.f32.mrb[0].mxu0
        %437 = vmatprep.mubr.bf16.mxu0 0
        %438 = vmatmul.mubr.bf16.gmra.mrb[0].mxu0 %v328
        %v439 = vpop.f32.mrb[0].mxu0
        %v440 = vpop.f32.mrb[0].mxu0
        %v441 = vpop.f32.mrb[0].mxu0
        %v442 = vpop.f32.mrb[0].mxu0
        %443 = vdwg.mxu0
        %v444 = vadd.f32 %v386, %v432
        %v445 = vadd.f32 %v387, %v435
        %s446 = scalar_lea.vmem [#allocation6], 16
        %v447 = vld [vmem:[%s446] sm:$0xf]
        %v448 = vld [vmem:[%s446 + $0x4] sm:$0xf]
        %v451 = vunpack.c.l.b16 %v447
        %v452 = vunpack.c.l.b16 %v448
        %v453 = vpack.c.b16 %v452, %v451
        %455 = vmatprep.subr.bf16.mxu0 0
        %456 = vmatpush1.bf16.msra.mxu0 %v453
        %457 = vmatprep.subr.bf16.mxu0 0
        %458 = vmatpush1.bf16.msra.mxu0 0
        %459 = vmatprep.subr.bf16.mxu0 0
        %460 = vmatpush1.bf16.msra.mxu0 0
        %461 = vmatprep.subr.bf16.mxu0 0
        %462 = vmatpush1.bf16.msra.mxu0 0
        %463 = vmatprep.subr.bf16.mxu0 0
        %464 = vmatpush1.bf16.msra.mxu0 0
        %465 = vmatprep.subr.bf16.mxu0 0
        %466 = vmatpush1.bf16.msra.mxu0 0
        %467 = vmatprep.subr.bf16.mxu0 0
        %468 = vmatpush1.bf16.msra.mxu0 0
        %469 = vmatprep.subr.bf16.mxu0 0
        %470 = vmatpush1.bf16.msra.mxu0 0
        %471 = vmatprep.subr.bf16.mxu0 0
        %472 = vmatpush1.bf16.msra.mxu0 0
        %473 = vmatprep.subr.bf16.mxu0 0
        %474 = vmatpush1.bf16.msra.mxu0 0
        %475 = vmatprep.subr.bf16.mxu0 0
        %476 = vmatpush1.bf16.msra.mxu0 0
        %477 = vmatprep.subr.bf16.mxu0 0
        %478 = vmatpush1.bf16.msra.mxu0 0
        %479 = vmatprep.subr.bf16.mxu0 0
        %480 = vmatpush1.bf16.msra.mxu0 0
        %481 = vmatprep.subr.bf16.mxu0 0
        %482 = vmatpush1.bf16.msra.mxu0 0
        %483 = vmatprep.subr.bf16.mxu0 0
        %484 = vmatpush1.bf16.msra.mxu0 0
        %485 = vmatprep.subr.bf16.mxu0 0
        %486 = vmatpush1.bf16.msra.mxu0 0
        %487 = vmatprep.mubr.bf16.mxu0 0
        %488 = vmatmul.mubr.bf16.gmra.mrb[0].mxu0 %v325
        %v489 = vpop.f32.mrb[0].mxu0
        %v490 = vadd.f32 0.0, %v489
        %v491 = vpop.f32.mrb[0].mxu0
        %v492 = vpop.f32.mrb[0].mxu0
        %v493 = vadd.f32 0.0, %v492
        %v494 = vpop.f32.mrb[0].mxu0
        %495 = vmatprep.mubr.bf16.mxu0 0
        %496 = vmatmul.mubr.bf16.gmra.mrb[0].mxu0 %v328
        %v497 = vpop.f32.mrb[0].mxu0
        %v498 = vadd.f32 0.0, %v497
        %v499 = vpop.f32.mrb[0].mxu0
        %v500 = vpop.f32.mrb[0].mxu0
        %v501 = vpop.f32.mrb[0].mxu0
        %502 = vdwg.mxu0
        %v503 = vrot.slane %v490, 1
        %v504 = vrot.slane %v493, 1
        %v505 = vrot.slane %v498, 1
        %vm506 = vcmp.lt.s32.totalorder %v382, 7
        %v507 = vsel %vm506, %v504, %v505
        %v508 = vsel %vm506, %v503, %v504
        %v509 = vadd.f32 %v444, %v508
        %v510 = vadd.f32 %v445, %v507
        %v511 = vld [vmem:[#allocation9] sm:$0x1]
        %v513 = vlaneseq
        %v514 = vshrl.u32 %v513, 7
        %v515 = vsub.s32 0, %v514
        %v516 = vrot.slane %v511, %v515
        %v518 = vadd.f32 %v509, %v516
        %v519 = vadd.f32 %v510, %v516
        %v520 = vmax.f32 %v518, 0.0
        %v521 = vmax.f32 %v519, 0.0
        %v522 = vpack.c.bf16 %v521, %v520
        %v524 = vunpack.c.l.b16 %v522
        %v525 = vunpack.c.h.b16 %v522
        %v526 = vpack.c.b16 %v524, %v524
        %v527 = vpack.c.b16 %v525, %v525
        %530 = vst.msk [vmem:[#allocation2] sm:$0xf] %vm298, %v526
        %531 = vst.msk [vmem:[#allocation2 + $0x4] sm:$0xf] %vm298, %v527
        %v532 = vld [vmem:[#allocation2] sm:$0xf]
        %v533 = vld [vmem:[#allocation2 + $0x4] sm:$0xf]
        %v534 = vld [vmem:[#allocation2 + $0x8] sm:$0xf]
        %v535 = vld [vmem:[#allocation8] sm:$0xf]
        %v536 = vld [vmem:[#allocation8 + $0x4] sm:$0xf]
        %v540 = vunpack.c.l.b16 %v532
        %v541 = vunpack.c.l.b16 %v533
        %v542 = vunpack.c.l.b16 %v534
        %v543 = vpack.c.b16 %v541, %v540
        %v544 = vpack.c.b16 %v542, %v542
        %v547 = vunpack.c.l.b16 %v535
        %v548 = vunpack.c.l.b16 %v536
        %v549 = vpack.c.b16 %v548, %v547
        %v552 = vsel %vm323, %v543, 0
        %v555 = vsel %vm323, %v544, 0
        %557 = vmatprep.subr.bf16.mxu0 0
        %558 = vmatpush1.bf16.msra.mxu0 %v549
        %559 = vmatprep.subr.bf16.mxu0 0
        %560 = vmatpush1.bf16.msra.mxu0 0
        %561 = vmatprep.subr.bf16.mxu0 0
        %562 = vmatpush1.bf16.msra.mxu0 0
        %563 = vmatprep.subr.bf16.mxu0 0
        %564 = vmatpush1.bf16.msra.mxu0 0
        %565 = vmatprep.subr.bf16.mxu0 0
        %566 = vmatpush1.bf16.msra.mxu0 0
        %567 = vmatprep.subr.bf16.mxu0 0
        %568 = vmatpush1.bf16.msra.mxu0 0
        %569 = vmatprep.subr.bf16.mxu0 0
        %570 = vmatpush1.bf16.msra.mxu0 0
        %571 = vmatprep.subr.bf16.mxu0 0
        %572 = vmatpush1.bf16.msra.mxu0 0
        %573 = vmatprep.subr.bf16.mxu0 0
        %574 = vmatpush1.bf16.msra.mxu0 0
        %575 = vmatprep.subr.bf16.mxu0 0
        %576 = vmatpush1.bf16.msra.mxu0 0
        %577 = vmatprep.subr.bf16.mxu0 0
        %578 = vmatpush1.bf16.msra.mxu0 0
        %579 = vmatprep.subr.bf16.mxu0 0
        %580 = vmatpush1.bf16.msra.mxu0 0
        %581 = vmatprep.subr.bf16.mxu0 0
        %582 = vmatpush1.bf16.msra.mxu0 0
        %583 = vmatprep.subr.bf16.mxu0 0
        %584 = vmatpush1.bf16.msra.mxu0 0
        %585 = vmatprep.subr.bf16.mxu0 0
        %586 = vmatpush1.bf16.msra.mxu0 0
        %587 = vmatprep.subr.bf16.mxu0 0
        %588 = vmatpush1.bf16.msra.mxu0 0
        %589 = vmatprep.mubr.bf16.mxu0 0
        %590 = vmatmul.mubr.bf16.gmra.mrb[0].mxu0 %v552
        %v591 = vpop.f32.mrb[0].mxu0
        %v592 = vadd.f32 0.0, %v591
        %v593 = vpop.f32.mrb[0].mxu0
        %v594 = vpop.f32.mrb[0].mxu0
        %v595 = vadd.f32 0.0, %v594
        %v596 = vpop.f32.mrb[0].mxu0
        %597 = vmatprep.mubr.bf16.mxu0 0
        %598 = vmatmul.mubr.bf16.gmra.mrb[0].mxu0 %v555
        %v599 = vpop.f32.mrb[0].mxu0
        %v600 = vadd.f32 0.0, %v599
        %v601 = vpop.f32.mrb[0].mxu0
        %v602 = vpop.f32.mrb[0].mxu0
        %v603 = vpop.f32.mrb[0].mxu0
        %604 = vdwg.mxu0
        %v605 = vrot.slane %v592, 7
        %v606 = vrot.slane %v595, 7
        %v607 = vrot.slane %v600, 7
        %v608 = vsel %vm383, %v605, %v606
        %v609 = vsel %vm383, %v607, %v605
        %v610 = vadd.f32 %v609, 0.0
        %v611 = vadd.f32 %v608, 0.0
        %s612 = scalar_lea.vmem [#allocation8], 8
        %v613 = vld [vmem:[%s612] sm:$0xf]
        %v614 = vld [vmem:[%s612 + $0x4] sm:$0xf]
        %v617 = vunpack.c.l.b16 %v613
        %v618 = vunpack.c.l.b16 %v614
        %v619 = vpack.c.b16 %v618, %v617
        %621 = vmatprep.subr.bf16.mxu0 0
        %622 = vmatpush1.bf16.msra.mxu0 %v619
        %623 = vmatprep.subr.bf16.mxu0 0
        %624 = vmatpush1.bf16.msra.mxu0 0
        %625 = vmatprep.subr.bf16.mxu0 0
        %626 = vmatpush1.bf16.msra.mxu0 0
        %627 = vmatprep.subr.bf16.mxu0 0
        %628 = vmatpush1.bf16.msra.mxu0 0
        %629 = vmatprep.subr.bf16.mxu0 0
        %630 = vmatpush1.bf16.msra.mxu0 0
        %631 = vmatprep.subr.bf16.mxu0 0
        %632 = vmatpush1.bf16.msra.mxu0 0
        %633 = vmatprep.subr.bf16.mxu0 0
        %634 = vmatpush1.bf16.msra.mxu0 0
        %635 = vmatprep.subr.bf16.mxu0 0
        %636 = vmatpush1.bf16.msra.mxu0 0
        %637 = vmatprep.subr.bf16.mxu0 0
        %638 = vmatpush1.bf16.msra.mxu0 0
        %639 = vmatprep.subr.bf16.mxu0 0
        %640 = vmatpush1.bf16.msra.mxu0 0
        %641 = vmatprep.subr.bf16.mxu0 0
        %642 = vmatpush1.bf16.msra.mxu0 0
        %643 = vmatprep.subr.bf16.mxu0 0
        %644 = vmatpush1.bf16.msra.mxu0 0
        %645 = vmatprep.subr.bf16.mxu0 0
        %646 = vmatpush1.bf16.msra.mxu0 0
        %647 = vmatprep.subr.bf16.mxu0 0
        %648 = vmatpush1.bf16.msra.mxu0 0
        %649 = vmatprep.subr.bf16.mxu0 0
        %650 = vmatpush1.bf16.msra.mxu0 0
        %651 = vmatprep.subr.bf16.mxu0 0
        %652 = vmatpush1.bf16.msra.mxu0 0
        %653 = vmatprep.mubr.bf16.mxu0 0
        %654 = vmatmul.mubr.bf16.gmra.mrb[0].mxu0 %v552
        %v655 = vpop.f32.mrb[0].mxu0
        %v656 = vadd.f32 0.0, %v655
        %v657 = vpop.f32.mrb[0].mxu0
        %v658 = vpop.f32.mrb[0].mxu0
        %v659 = vadd.f32 0.0, %v658
        %v660 = vpop.f32.mrb[0].mxu0
        %661 = vmatprep.mubr.bf16.mxu0 0
        %662 = vmatmul.mubr.bf16.gmra.mrb[0].mxu0 %v555
        %v663 = vpop.f32.mrb[0].mxu0
        %v664 = vpop.f32.mrb[0].mxu0
        %v665 = vpop.f32.mrb[0].mxu0
        %v666 = vpop.f32.mrb[0].mxu0
        %667 = vdwg.mxu0
        %v668 = vadd.f32 %v610, %v656
        %v669 = vadd.f32 %v611, %v659
        %s670 = scalar_lea.vmem [#allocation8], 16
        %v671 = vld [vmem:[%s670] sm:$0xf]
        %v672 = vld [vmem:[%s670 + $0x4] sm:$0xf]
        %v675 = vunpack.c.l.b16 %v671
        %v676 = vunpack.c.l.b16 %v672
        %v677 = vpack.c.b16 %v676, %v675
        %679 = vmatprep.subr.bf16.mxu0 0
        %680 = vmatpush1.bf16.msra.mxu0 %v677
        %681 = vmatprep.subr.bf16.mxu0 0
        %682 = vmatpush1.bf16.msra.mxu0 0
        %683 = vmatprep.subr.bf16.mxu0 0
        %684 = vmatpush1.bf16.msra.mxu0 0
        %685 = vmatprep.subr.bf16.mxu0 0
        %686 = vmatpush1.bf16.msra.mxu0 0
        %687 = vmatprep.subr.bf16.mxu0 0
        %688 = vmatpush1.bf16.msra.mxu0 0
        %689 = vmatprep.subr.bf16.mxu0 0
        %690 = vmatpush1.bf16.msra.mxu0 0
        %691 = vmatprep.subr.bf16.mxu0 0
        %692 = vmatpush1.bf16.msra.mxu0 0
        %693 = vmatprep.subr.bf16.mxu0 0
        %694 = vmatpush1.bf16.msra.mxu0 0
        %695 = vmatprep.subr.bf16.mxu0 0
        %696 = vmatpush1.bf16.msra.mxu0 0
        %697 = vmatprep.subr.bf16.mxu0 0
        %698 = vmatpush1.bf16.msra.mxu0 0
        %699 = vmatprep.subr.bf16.mxu0 0
        %700 = vmatpush1.bf16.msra.mxu0 0
        %701 = vmatprep.subr.bf16.mxu0 0
        %702 = vmatpush1.bf16.msra.mxu0 0
        %703 = vmatprep.subr.bf16.mxu0 0
        %704 = vmatpush1.bf16.msra.mxu0 0
        %705 = vmatprep.subr.bf16.mxu0 0
        %706 = vmatpush1.bf16.msra.mxu0 0
        %707 = vmatprep.subr.bf16.mxu0 0
        %708 = vmatpush1.bf16.msra.mxu0 0
        %709 = vmatprep.subr.bf16.mxu0 0
        %710 = vmatpush1.bf16.msra.mxu0 0
        %711 = vmatprep.mubr.bf16.mxu0 0
        %712 = vmatmul.mubr.bf16.gmra.mrb[0].mxu0 %v552
        %v713 = vpop.f32.mrb[0].mxu0
        %v714 = vadd.f32 0.0, %v713
        %v715 = vpop.f32.mrb[0].mxu0
        %v716 = vpop.f32.mrb[0].mxu0
        %v717 = vadd.f32 0.0, %v716
        %v718 = vpop.f32.mrb[0].mxu0
        %719 = vmatprep.mubr.bf16.mxu0 0
        %720 = vmatmul.mubr.bf16.gmra.mrb[0].mxu0 %v555
        %v721 = vpop.f32.mrb[0].mxu0
        %v722 = vadd.f32 0.0, %v721
        %v723 = vpop.f32.mrb[0].mxu0
        %v724 = vpop.f32.mrb[0].mxu0
        %v725 = vpop.f32.mrb[0].mxu0
        %726 = vdwg.mxu0
        %v727 = vrot.slane %v714, 1
        %v728 = vrot.slane %v717, 1
        %v729 = vrot.slane %v722, 1
        %v730 = vsel %vm506, %v728, %v729
        %v731 = vsel %vm506, %v727, %v728
        %v732 = vadd.f32 %v668, %v731
        %v733 = vadd.f32 %v669, %v730
        %v734 = vld [vmem:[#allocation11] sm:$0x1]
        %v736 = vlaneseq
        %v737 = vshrl.u32 %v736, 7
        %v738 = vsub.s32 0, %v737
        %v739 = vrot.slane %v734, %v738
        %v741 = vadd.f32 %v732, %v739
        %v742 = vadd.f32 %v733, %v739
        %v743 = vmax.f32 %v741, 0.0
        %v744 = vmax.f32 %v742, 0.0
        %v745 = vpack.c.bf16 %v744, %v743
        %v747 = vunpack.c.l.b16 %v745
        %v748 = vunpack.c.h.b16 %v745
        %v749 = vpack.c.b16 %v747, %v747
        %v750 = vpack.c.b16 %v748, %v748
        %753 = vst.msk [vmem:[%s296] sm:$0xf] %vm298, %v749
        %754 = vst.msk [vmem:[%s296 + $0x4] sm:$0xf] %vm298, %v750
        %s755 = sand.u32 %s142, 1
        %s756 = scalar_lea.sflag [#allocation5], %s755
        %s757 = sand.u32 %s142, 1
        %s758 = smul.addr %s757, 8
        %s759 = scalar_lea.vmem [#allocation12], %s758
        // Predicated region
        $region61: #{encoder_prenet_forward.2} parent=39 // pred_check
          %p760 = pneg %p152
        $region62: #{encoder_prenet_forward.2} parent=39 // pred_check_branch
          %762 = sbr.rel (%p760) target = $region64
        $region63: #{encoder_prenet_forward.2} parent=39 // pred_region
          %s764 = ssub.s32 128, 128
          %765 = vsyncadd %s756, %s764
          %s766 = smul.addr %s24, 2
          %s767 = smul.addr %s766, 64
          %s768 = scalar_lea.hbm %s5, %s767
          %s769 = sshll.u32 %s759, 4
          %s770 = int_to_ptr.vmem [resolvable:$true] %s769
          %775 = dma.vmem_to_hbm [thread:$0]  %s770, 128, %s768, %s756, 64, 64, 4
        $region64: #{encoder_prenet_forward.2} parent=39 // pred_fallthru
          _
      $region40: #{encoder_prenet_forward.2} parent=5 // pred_fallthru
        _
      %p776 = scmp.le.s32.totalorder 2, %s19
      // Predicated region
      $region65: #{encoder_prenet_forward.2} parent=5 // pred_check
        %p777 = pneg %p776
      $region66: #{encoder_prenet_forward.2} parent=5 // pred_check_branch
        %779 = sbr.rel (%p777) target = $region68
      $region67: #{encoder_prenet_forward.2} parent=5 // pred_region
        %s780 = ssub.s32 %s19, 2
        // Predicated region
        $region69: #{encoder_prenet_forward.2} parent=67 // pred_check
          %p781 = pneg %p158
        $region70: #{encoder_prenet_forward.2} parent=67 // pred_check_branch
          %783 = sbr.rel (%p781) target = $region72
        $region71: #{encoder_prenet_forward.2} parent=67 // pred_region
          %s784 = sand.u32 %s143, 1
          %s785 = scalar_lea.sflag [#allocation5], %s784
          %s786 = sand.u32 %s143, 1
          %s787 = smul.addr %s786, 8
          %s788 = scalar_lea.vmem [#allocation12], %s787
          %789 = dma.done %s785, 128
        $region72: #{encoder_prenet_forward.2} parent=67 // pred_fallthru
          _
      $region68: #{encoder_prenet_forward.2} parent=5 // pred_fallthru
        _
    $region6: #{encoder_prenet_forward.2} parent=1 // loop_footer
      %s23 = sadd.s32 1, %s19
    $region7: #{encoder_prenet_forward.2} parent=1 // loop_footer_branch
      %18 = sbr.rel target = $region3
    $region8: #{encoder_prenet_forward.2} parent=1 // loop_exit
      _
    %790 = vsyncpa [#allocation4], 1
    %s791 = scalar_lea.sflag [#allocation4], 1
    %792 = vsyncpa %s791, 1
    %793 = vsyncpa [#allocation7], 1
    %794 = vsyncpa [#allocation10], 1
    %795 = vsyncpa [#allocation5], 1
    %s796 = scalar_lea.sflag [#allocation5], 1
    %797 = vsyncpa %s796, 1

</llo_original>
